<compile_context>
chip_gen: v7x
topology: tpu7x:2x2x1
jax: 0.10.0
libtpu: 0.0.40
codegen_flags: <defaults>
</compile_context>

<pallas_src>
import numpy as np
import jax
import jax.numpy as jnp
from jax.experimental import pallas as pl
from jax.experimental.pallas import tpu as pltpu


def _round_up(x, m):
    return (x + m - 1) // m * m


def _cutout_kernel(x_ref, wy_ref, wxt_ref, o_ref):
    # x_ref  : (B, C, H, W)         full image, resident across the grid
    # wy_ref : (Gb, cs, H)          row pooling/crop matrices for this block
    # wxt_ref: (W, Gb*csp)          col pooling matrices, pre-transposed, lane-padded
    # o_ref  : (B*C*cs, Gb*csp)     lane-dense 128-aligned output slab block
    B, C, H, W = x_ref.shape
    gb, cs, _ = wy_ref.shape
    csp = wxt_ref.shape[1] // gb
    M = B * C
    bf16 = x_ref.dtype == jnp.bfloat16

    # ---- Step 1: ONE 2D MXU matmul; this block's cutouts stacked on lanes.
    x2 = x_ref[...].reshape(M * H, W)                       # leading-dim merge only
    t = jnp.dot(x2, wxt_ref[...],
                preferred_element_type=jnp.float32)         # (M*H, gb*csp), f32 acc
    if bf16:
        t = t.astype(jnp.bfloat16)                          # only in-kernel downcast

    # ---- Step 2: Wy contraction as plain 2D MXU matmuls (no broadcast, no
    # batched matmul). All slices are static and 128-lane / 8-sublane aligned
    # -> free relabels; each result is stored immediately (bounded live range,
    # unmasked full-width store).
    for n in range(gb):
        wy_n = wy_ref[n]                                    # (cs, H)
        for m in range(M):
            t_mn = t[m * H:(m + 1) * H, n * csp:(n + 1) * csp]       # (H, csp)
            o_mn = jnp.dot(wy_n, t_mn,
                           preferred_element_type=jnp.float32)       # (cs, csp)
            o_ref[m * cs:(m + 1) * cs, n * csp:(n + 1) * csp] = (
                o_mn.astype(o_ref.dtype))


def make_cutouts_pallas(x, wy, wxt, cut_size, *, cut_block=1, use_bf16=False,
                        vmem_limit_bytes=None):
    """x: (B,C,H,W); wy: (cutn,cs,H); wxt: (W, cutn*csp) lane-padded.
    Returns (cutn*B, C, cs, cs), same dtype as x.

    cut_block: cutouts per grid step. Default 1 gives n_blocks = cutn pipeline
      steps (>=3 hides the output writeback; even counts keep both v7x
      TensorCores busy under dimension_semantics=('parallel',)). Per-block
      VMEM ~ x + 2*(wy,wxt,out blocks) + t slab; raise vmem_limit_bytes for
      large configs (v5e scoped default 16 MiB, v6e/v7x 32 MiB).
    """
    B, C, H, W = x.shape
    cutn, cs, Hy = wy.shape
    assert cs == cut_size and Hy == H
    assert wxt.shape[0] == W and wxt.shape[1] % cutn == 0
    csp = wxt.shape[1] // cutn
    assert csp >= cut_size
    assert cutn % cut_block == 0
    n_blocks = cutn // cut_block
    # Hard Mosaic constraint when the lane axis is blocked (not a perf hint).
    assert n_blocks == 1 or (cut_block * csp) % 128 == 0, (
        "per-block lane width (cut_block*csp) must be a multiple of 128")
    M = B * C
    out_dtype = x.dtype

    if use_bf16:
        # Wrapper-side casts: halve HBM->VMEM bytes, no in-kernel pack pass.
        x = x.astype(jnp.bfloat16)
        wy = wy.astype(jnp.bfloat16)
        wxt = wxt.astype(jnp.bfloat16)

    def call(x_single_buffered):
        x_kw = {"pipeline_mode": pl.Buffered(1)} if x_single_buffered else {}
        return pl.pallas_call(
            _cutout_kernel,
            out_shape=jax.ShapeDtypeStruct((M * cut_size, cutn * csp), out_dtype),
            grid=(n_blocks,),
            in_specs=[
                # full image, constant index -> fetched once, resident
                pl.BlockSpec((B, C, H, W), lambda g: (0, 0, 0, 0), **x_kw),
                pl.BlockSpec((cut_block, cut_size, H), lambda g: (g, 0, 0)),
                pl.BlockSpec((W, cut_block * csp), lambda g: (0, g)),
            ],
            out_specs=pl.BlockSpec((M * cut_size, cut_block * csp),
                                   lambda g: (0, g)),
            compiler_params=pltpu.CompilerParams(
                dimension_semantics=("parallel",),
                vmem_limit_bytes=vmem_limit_bytes),
        )(x, wy, wxt)

    try:
        out2d = call(True)          # x single-buffered (saves one image copy of VMEM)
    except Exception:               # pipeline_mode/Buffered(1) unsupported -> default
        out2d = call(False)

    # Wrapper-side layout plumbing: slab rows are (b, c, p), cols are (n, q_padded).
    out = out2d.reshape(B, C, cut_size, cutn, csp)[..., :cut_size]
    out = out.transpose(3, 0, 1, 2, 4)            # (n, b, c, p, q) == torch.cat order
    return out.reshape(cutn * B, C, cut_size, cut_size)


def _pool_weight_matrix(side, size, offset, cut_size):
    """(cut_size, side) matrix M s.t. M @ v == adaptive_avg_pool1d of
    v[offset:offset+size] to cut_size (PyTorch floor/ceil window semantics)."""
    i = np.arange(cut_size)
    start = (i * size) // cut_size
    end = ((i + 1) * size + cut_size - 1) // cut_size            # ceil
    idx = np.arange(side)
    mask = ((idx[None, :] >= offset + start[:, None]) &
            (idx[None, :] < offset + end[:, None]))
    return mask.astype(np.float32) / (end - start)[:, None].astype(np.float32)


def build_cutout_weights(key, H, W, cut_size, cutn, cut_pow=1.0, *, lane_pad=128):
    """Draw all random cutout geometry in one batched call (single device->host
    sync) and bake it into pooling matrices. Each cutout's column block in wxt
    is zero-padded to csp = round_up(cut_size, lane_pad) so the kernel is fully
    128-lane aligned. Returns (wy, wxt, wx, csp)."""
    max_size = min(W, H)
    min_size = min(W, H, cut_size)
    # TODO(synk): torch.rand/torch.randint host RNG has no in-kernel analogue;
    # geometry is drawn host-side (distributionally equivalent, not
    # bit-reproducible against a torch seed) and baked into the matrices.
    u = np.asarray(jax.random.uniform(key, (cutn, 3)))           # one sync
    sizes = (u[:, 0] ** cut_pow * (max_size - min_size) + min_size).astype(np.int64)
    offx = (u[:, 1] * (W - sizes + 1)).astype(np.int64)          # uniform in [0, W-size]
    offy = (u[:, 2] * (H - sizes + 1)).astype(np.int64)          # uniform in [0, H-size]

    csp = _round_up(cut_size, lane_pad)
    wy = np.stack([_pool_weight_matrix(H, int(sizes[n]), int(offy[n]), cut_size)
                   for n in range(cutn)])                         # (cutn, cs, H)
    wx = np.stack([_pool_weight_matrix(W, int(sizes[n]), int(offx[n]), cut_size)
                   for n in range(cutn)])                         # (cutn, cs, W)
    # Lane-pad each cutout to csp columns and pre-transpose to (W, cutn*csp).
    wx_pad = np.zeros((cutn, csp, W), np.float32)
    wx_pad[:, :cut_size, :] = wx
    wxt = np.transpose(wx_pad, (2, 0, 1)).reshape(W, cutn * csp)
    return jnp.asarray(wy), jnp.asarray(wxt), jnp.asarray(wx), csp


if __name__ == "__main__":
    B, C, H, W = 2, 4, 16, 16
    cut_size, cutn, cut_pow = 8, 4, 1.0

    key = jax.random.PRNGKey(0)
    k_x, k_cut = jax.random.split(key)
    x = jax.random.normal(k_x, (B, C, H, W), dtype=jnp.float32)

    wy, wxt, wx, csp = build_cutout_weights(k_cut, H, W, cut_size, cutn, cut_pow)

    # f32 path (faithful to the PyTorch f32 semantics)
    out = make_cutouts_pallas(x, wy, wxt, cut_size)
    out = jax.block_until_ready(out)
    assert out.shape == (cutn * B, C, cut_size, cut_size), out.shape
    assert out.dtype == x.dtype

    ref = jnp.einsum('nph,bchw,nqw->nbcpq', wy, x, wx).reshape(out.shape)
    np.testing.assert_allclose(np.asarray(out), np.asarray(ref),
                               rtol=1e-5, atol=1e-5)

    # Multi-cutout-per-block path (exercises gb > 1 and the 128-aligned blocks)
    out_blk = jax.block_until_ready(
        make_cutouts_pallas(x, wy, wxt, cut_size, cut_block=2))
    np.testing.assert_allclose(np.asarray(out_blk), np.asarray(ref),
                               rtol=1e-5, atol=1e-5)

    # bf16-operand / f32-accumulate fast path (looser tolerance)
    out_bf16 = jax.block_until_ready(
        make_cutouts_pallas(x, wy, wxt, cut_size, use_bf16=True))
    np.testing.assert_allclose(np.asarray(out_bf16), np.asarray(ref),
                               rtol=5e-2, atol=5e-2)

    print("KERNEL_OK")
</pallas_src>

<mosaic_0001>
module attributes {stable_mosaic.version = 11 : i64} {
  func.func @_cutout_kernel(%arg0: i32, %arg1: memref<2x4x16x16xf32, #tpu.memory_space<vmem>>, %arg2: memref<1x8x16xf32, #tpu.memory_space<vmem>>, %arg3: memref<16x128xf32, #tpu.memory_space<vmem>>, %arg4: memref<64x128xf32, #tpu.memory_space<vmem>>) attributes {dimension_semantics = [#tpu.dimension_semantics<parallel>], iteration_bounds = array<i64: 4>, scalar_prefetch = 0 : i64, scratch_operands = 0 : i64, tpu.core_type = #tpu.core_type<tc>, window_params = [{pipeline_mode = #tpu.pipeline_mode<synchronous>, transform_indices = @transform_0, window_bounds = array<i64: 2, 4, 16, 16>}, {transform_indices = @transform_1, window_bounds = array<i64: 1, 8, 16>}, {transform_indices = @transform_2, window_bounds = array<i64: 16, 128>}, {transform_indices = @transform_3, window_bounds = array<i64: 64, 128>}]} {
    %c0 = arith.constant 0 : index
    %c0_0 = arith.constant 0 : index
    %c0_1 = arith.constant 0 : index
    %c0_2 = arith.constant 0 : index
    %0 = vector.load %arg1[%c0, %c0_0, %c0_1, %c0_2] : memref<2x4x16x16xf32, #tpu.memory_space<vmem>>, vector<2x4x16x16xf32>
    %1 = vector.shape_cast %0 : vector<2x4x16x16xf32> to vector<128x16xf32>
    %c0_3 = arith.constant 0 : index
    %c0_4 = arith.constant 0 : index
    %2 = vector.load %arg3[%c0_3, %c0_4] : memref<16x128xf32, #tpu.memory_space<vmem>>, vector<16x128xf32>
    %cst = arith.constant dense<0.000000e+00> : vector<128x128xf32>
    %3 = tpu.matmul %1, %2, %cst {dimension_numbers = #tpu.dot_dimension_numbers<[1], [0], [0], [1], [0, 0, 1, 1], [], []>} : vector<128x16xf32>, vector<16x128xf32>, vector<128x128xf32> -> vector<128x128xf32>
    %c0_5 = arith.constant 0 : index
    %c0_6 = arith.constant 0 : index
    %c0_7 = arith.constant 0 : index
    %4 = vector.load %arg2[%c0_5, %c0_6, %c0_7] : memref<1x8x16xf32, #tpu.memory_space<vmem>>, vector<1x8x16xf32>
    %5 = vector.shape_cast %4 : vector<1x8x16xf32> to vector<8x16xf32>
    %6 = vector.extract_strided_slice %3 {offsets = [0, 0], sizes = [16, 128], strides = [1, 1]} : vector<128x128xf32> to vector<16x128xf32>
    %cst_8 = arith.constant dense<0.000000e+00> : vector<8x128xf32>
    %7 = tpu.matmul %5, %6, %cst_8 {dimension_numbers = #tpu.dot_dimension_numbers<[1], [0], [0], [1], [0, 0, 1, 1], [], []>} : vector<8x16xf32>, vector<16x128xf32>, vector<8x128xf32> -> vector<8x128xf32>
    %c0_9 = arith.constant 0 : index
    %c0_10 = arith.constant 0 : index
    %8 = vector.load %arg4[%c0_9, %c0_10] : memref<64x128xf32, #tpu.memory_space<vmem>>, vector<8x128xf32>
    tpu.vector_store %arg4[%c0_9, %c0_10], %7 {strides = array<i32>} : memref<64x128xf32, #tpu.memory_space<vmem>>, vector<8x128xf32>,
    %9 = vector.extract_strided_slice %3 {offsets = [16, 0], sizes = [16, 128], strides = [1, 1]} : vector<128x128xf32> to vector<16x128xf32>
    %cst_11 = arith.constant dense<0.000000e+00> : vector<8x128xf32>
    %10 = tpu.matmul %5, %9, %cst_11 {dimension_numbers = #tpu.dot_dimension_numbers<[1], [0], [0], [1], [0, 0, 1, 1], [], []>} : vector<8x16xf32>, vector<16x128xf32>, vector<8x128xf32> -> vector<8x128xf32>
    %c8 = arith.constant 8 : index
    %c0_12 = arith.constant 0 : index
    %11 = vector.load %arg4[%c8, %c0_12] : memref<64x128xf32, #tpu.memory_space<vmem>>, vector<8x128xf32>
    tpu.vector_store %arg4[%c8, %c0_12], %10 {strides = array<i32>} : memref<64x128xf32, #tpu.memory_space<vmem>>, vector<8x128xf32>,
    %12 = vector.extract_strided_slice %3 {offsets = [32, 0], sizes = [16, 128], strides = [1, 1]} : vector<128x128xf32> to vector<16x128xf32>
    %cst_13 = arith.constant dense<0.000000e+00> : vector<8x128xf32>
    %13 = tpu.matmul %5, %12, %cst_13 {dimension_numbers = #tpu.dot_dimension_numbers<[1], [0], [0], [1], [0, 0, 1, 1], [], []>} : vector<8x16xf32>, vector<16x128xf32>, vector<8x128xf32> -> vector<8x128xf32>
    %c16 = arith.constant 16 : index
    %c0_14 = arith.constant 0 : index
    %14 = vector.load %arg4[%c16, %c0_14] : memref<64x128xf32, #tpu.memory_space<vmem>>, vector<8x128xf32>
    tpu.vector_store %arg4[%c16, %c0_14], %13 {strides = array<i32>} : memref<64x128xf32, #tpu.memory_space<vmem>>, vector<8x128xf32>,
    %15 = vector.extract_strided_slice %3 {offsets = [48, 0], sizes = [16, 128], strides = [1, 1]} : vector<128x128xf32> to vector<16x128xf32>
    %cst_15 = arith.constant dense<0.000000e+00> : vector<8x128xf32>
    %16 = tpu.matmul %5, %15, %cst_15 {dimension_numbers = #tpu.dot_dimension_numbers<[1], [0], [0], [1], [0, 0, 1, 1], [], []>} : vector<8x16xf32>, vector<16x128xf32>, vector<8x128xf32> -> vector<8x128xf32>
    %c24 = arith.constant 24 : index
    %c0_16 = arith.constant 0 : index
    %17 = vector.load %arg4[%c24, %c0_16] : memref<64x128xf32, #tpu.memory_space<vmem>>, vector<8x128xf32>
    tpu.vector_store %arg4[%c24, %c0_16], %16 {strides = array<i32>} : memref<64x128xf32, #tpu.memory_space<vmem>>, vector<8x128xf32>,
    %18 = vector.extract_strided_slice %3 {offsets = [64, 0], sizes = [16, 128], strides = [1, 1]} : vector<128x128xf32> to vector<16x128xf32>
    %cst_17 = arith.constant dense<0.000000e+00> : vector<8x128xf32>
    %19 = tpu.matmul %5, %18, %cst_17 {dimension_numbers = #tpu.dot_dimension_numbers<[1], [0], [0], [1], [0, 0, 1, 1], [], []>} : vector<8x16xf32>, vector<16x128xf32>, vector<8x128xf32> -> vector<8x128xf32>
    %c32 = arith.constant 32 : index
    %c0_18 = arith.constant 0 : index
    %20 = vector.load %arg4[%c32, %c0_18] : memref<64x128xf32, #tpu.memory_space<vmem>>, vector<8x128xf32>
    tpu.vector_store %arg4[%c32, %c0_18], %19 {strides = array<i32>} : memref<64x128xf32, #tpu.memory_space<vmem>>, vector<8x128xf32>,
    %21 = vector.extract_strided_slice %3 {offsets = [80, 0], sizes = [16, 128], strides = [1, 1]} : vector<128x128xf32> to vector<16x128xf32>
    %cst_19 = arith.constant dense<0.000000e+00> : vector<8x128xf32>
    %22 = tpu.matmul %5, %21, %cst_19 {dimension_numbers = #tpu.dot_dimension_numbers<[1], [0], [0], [1], [0, 0, 1, 1], [], []>} : vector<8x16xf32>, vector<16x128xf32>, vector<8x128xf32> -> vector<8x128xf32>
    %c40 = arith.constant 40 : index
    %c0_20 = arith.constant 0 : index
    %23 = vector.load %arg4[%c40, %c0_20] : memref<64x128xf32, #tpu.memory_space<vmem>>, vector<8x128xf32>
    tpu.vector_store %arg4[%c40, %c0_20], %22 {strides = array<i32>} : memref<64x128xf32, #tpu.memory_space<vmem>>, vector<8x128xf32>,
    %24 = vector.extract_strided_slice %3 {offsets = [96, 0], sizes = [16, 128], strides = [1, 1]} : vector<128x128xf32> to vector<16x128xf32>
    %cst_21 = arith.constant dense<0.000000e+00> : vector<8x128xf32>
    %25 = tpu.matmul %5, %24, %cst_21 {dimension_numbers = #tpu.dot_dimension_numbers<[1], [0], [0], [1], [0, 0, 1, 1], [], []>} : vector<8x16xf32>, vector<16x128xf32>, vector<8x128xf32> -> vector<8x128xf32>
    %c48 = arith.constant 48 : index
    %c0_22 = arith.constant 0 : index
    %26 = vector.load %arg4[%c48, %c0_22] : memref<64x128xf32, #tpu.memory_space<vmem>>, vector<8x128xf32>
    tpu.vector_store %arg4[%c48, %c0_22], %25 {strides = array<i32>} : memref<64x128xf32, #tpu.memory_space<vmem>>, vector<8x128xf32>,
    %27 = vector.extract_strided_slice %3 {offsets = [112, 0], sizes = [16, 128], strides = [1, 1]} : vector<128x128xf32> to vector<16x128xf32>
    %cst_23 = arith.constant dense<0.000000e+00> : vector<8x128xf32>
    %28 = tpu.matmul %5, %27, %cst_23 {dimension_numbers = #tpu.dot_dimension_numbers<[1], [0], [0], [1], [0, 0, 1, 1], [], []>} : vector<8x16xf32>, vector<16x128xf32>, vector<8x128xf32> -> vector<8x128xf32>
    %c56 = arith.constant 56 : index
    %c0_24 = arith.constant 0 : index
    %29 = vector.load %arg4[%c56, %c0_24] : memref<64x128xf32, #tpu.memory_space<vmem>>, vector<8x128xf32>
    tpu.vector_store %arg4[%c56, %c0_24], %28 {strides = array<i32>} : memref<64x128xf32, #tpu.memory_space<vmem>>, vector<8x128xf32>,
    return
  }
  func.func @transform_0(%arg0: i32) -> (i32, i32, i32, i32) {
    %c0_i32 = arith.constant 0 : i32
    %c0_i32_0 = arith.constant 0 : i32
    %c0_i32_1 = arith.constant 0 : i32
    %c0_i32_2 = arith.constant 0 : i32
    %c0_i32_3 = arith.constant 0 : i32
    return %c0_i32, %c0_i32_0, %c0_i32_1, %c0_i32_2 : i32, i32, i32, i32
  }
  func.func @transform_1(%arg0: i32) -> (i32, i32, i32) {
    %c0_i32 = arith.constant 0 : i32
    %c0_i32_0 = arith.constant 0 : i32
    %c0_i32_1 = arith.constant 0 : i32
    return %arg0, %c0_i32, %c0_i32_0 : i32, i32, i32
  }
  func.func @transform_2(%arg0: i32) -> (i32, i32) {
    %c0_i32 = arith.constant 0 : i32
    %c0_i32_0 = arith.constant 0 : i32
    return %c0_i32, %arg0 : i32, i32
  }
  func.func @transform_3(%arg0: i32) -> (i32, i32) {
    %c0_i32 = arith.constant 0 : i32
    %c0_i32_0 = arith.constant 0 : i32
    return %c0_i32, %arg0 : i32, i32
  }
}

module attributes {stable_mosaic.version = 11 : i64} {
  func.func @_cutout_kernel(%arg0: i32, %arg1: memref<2x4x16x16xf32, #tpu.memory_space<vmem>>, %arg2: memref<1x8x16xf32, #tpu.memory_space<vmem>>, %arg3: memref<16x128xf32, #tpu.memory_space<vmem>>, %arg4: memref<64x128xf32, #tpu.memory_space<vmem>>) attributes {dimension_semantics = [#tpu.dimension_semantics<parallel>], iteration_bounds = array<i64: 4>, scalar_prefetch = 0 : i64, scratch_operands = 0 : i64, tpu.core_type = #tpu.core_type<tc>, window_params = [{pipeline_mode = #tpu.pipeline_mode<synchronous>, transform_indices = @transform_0, window_bounds = array<i64: 2, 4, 16, 16>}, {transform_indices = @transform_1, window_bounds = array<i64: 1, 8, 16>}, {transform_indices = @transform_2, window_bounds = array<i64: 16, 128>}, {transform_indices = @transform_3, window_bounds = array<i64: 64, 128>}]} {
    %c0 = arith.constant 0 : index
    %c0_0 = arith.constant 0 : index
    %c0_1 = arith.constant 0 : index
    %c0_2 = arith.constant 0 : index
    %0 = vector.load %arg1[%c0, %c0_0, %c0_1, %c0_2] : memref<2x4x16x16xf32, #tpu.memory_space<vmem>>, vector<2x4x16x16xf32>
    %1 = vector.shape_cast %0 : vector<2x4x16x16xf32> to vector<128x16xf32>
    %c0_3 = arith.constant 0 : index
    %c0_4 = arith.constant 0 : index
    %2 = vector.load %arg3[%c0_3, %c0_4] : memref<16x128xf32, #tpu.memory_space<vmem>>, vector<16x128xf32>
    %cst = arith.constant dense<0.000000e+00> : vector<128x128xf32>
    %3 = tpu.matmul %1, %2, %cst {dimension_numbers = #tpu.dot_dimension_numbers<[1], [0], [0], [1], [0, 0, 1, 1], [], []>} : vector<128x16xf32>, vector<16x128xf32>, vector<128x128xf32> -> vector<128x128xf32>
    %c0_5 = arith.constant 0 : index
    %c0_6 = arith.constant 0 : index
    %c0_7 = arith.constant 0 : index
    %4 = vector.load %arg2[%c0_5, %c0_6, %c0_7] : memref<1x8x16xf32, #tpu.memory_space<vmem>>, vector<1x8x16xf32>
    %5 = vector.shape_cast %4 : vector<1x8x16xf32> to vector<8x16xf32>
    %6 = vector.extract_strided_slice %3 {offsets = [0, 0], sizes = [16, 128], strides = [1, 1]} : vector<128x128xf32> to vector<16x128xf32>
    %cst_8 = arith.constant dense<0.000000e+00> : vector<8x128xf32>
    %7 = tpu.matmul %5, %6, %cst_8 {dimension_numbers = #tpu.dot_dimension_numbers<[1], [0], [0], [1], [0, 0, 1, 1], [], []>} : vector<8x16xf32>, vector<16x128xf32>, vector<8x128xf32> -> vector<8x128xf32>
    %c0_9 = arith.constant 0 : index
    %c0_10 = arith.constant 0 : index
    %8 = vector.load %arg4[%c0_9, %c0_10] : memref<64x128xf32, #tpu.memory_space<vmem>>, vector<8x128xf32>
    tpu.vector_store %arg4[%c0_9, %c0_10], %7 {strides = array<i32>} : memref<64x128xf32, #tpu.memory_space<vmem>>, vector<8x128xf32>,
    %9 = vector.extract_strided_slice %3 {offsets = [16, 0], sizes = [16, 128], strides = [1, 1]} : vector<128x128xf32> to vector<16x128xf32>
    %cst_11 = arith.constant dense<0.000000e+00> : vector<8x128xf32>
    %10 = tpu.matmul %5, %9, %cst_11 {dimension_numbers = #tpu.dot_dimension_numbers<[1], [0], [0], [1], [0, 0, 1, 1], [], []>} : vector<8x16xf32>, vector<16x128xf32>, vector<8x128xf32> -> vector<8x128xf32>
    %c8 = arith.constant 8 : index
    %c0_12 = arith.constant 0 : index
    %11 = vector.load %arg4[%c8, %c0_12] : memref<64x128xf32, #tpu.memory_space<vmem>>, vector<8x128xf32>
    tpu.vector_store %arg4[%c8, %c0_12], %10 {strides = array<i32>} : memref<64x128xf32, #tpu.memory_space<vmem>>, vector<8x128xf32>,
    %12 = vector.extract_strided_slice %3 {offsets = [32, 0], sizes = [16, 128], strides = [1, 1]} : vector<128x128xf32> to vector<16x128xf32>
    %cst_13 = arith.constant dense<0.000000e+00> : vector<8x128xf32>
    %13 = tpu.matmul %5, %12, %cst_13 {dimension_numbers = #tpu.dot_dimension_numbers<[1], [0], [0], [1], [0, 0, 1, 1], [], []>} : vector<8x16xf32>, vector<16x128xf32>, vector<8x128xf32> -> vector<8x128xf32>
    %c16 = arith.constant 16 : index
    %c0_14 = arith.constant 0 : index
    %14 = vector.load %arg4[%c16, %c0_14] : memref<64x128xf32, #tpu.memory_space<vmem>>, vector<8x128xf32>
    tpu.vector_store %arg4[%c16, %c0_14], %13 {strides = array<i32>} : memref<64x128xf32, #tpu.memory_space<vmem>>, vector<8x128xf32>,
    %15 = vector.extract_strided_slice %3 {offsets = [48, 0], sizes = [16, 128], strides = [1, 1]} : vector<128x128xf32> to vector<16x128xf32>
    %cst_15 = arith.constant dense<0.000000e+00> : vector<8x128xf32>
    %16 = tpu.matmul %5, %15, %cst_15 {dimension_numbers = #tpu.dot_dimension_numbers<[1], [0], [0], [1], [0, 0, 1, 1], [], []>} : vector<8x16xf32>, vector<16x128xf32>, vector<8x128xf32> -> vector<8x128xf32>
    %c24 = arith.constant 24 : index
    %c0_16 = arith.constant 0 : index
    %17 = vector.load %arg4[%c24, %c0_16] : memref<64x128xf32, #tpu.memory_space<vmem>>, vector<8x128xf32>
    tpu.vector_store %arg4[%c24, %c0_16], %16 {strides = array<i32>} : memref<64x128xf32, #tpu.memory_space<vmem>>, vector<8x128xf32>,
    %18 = vector.extract_strided_slice %3 {offsets = [64, 0], sizes = [16, 128], strides = [1, 1]} : vector<128x128xf32> to vector<16x128xf32>
    %cst_17 = arith.constant dense<0.000000e+00> : vector<8x128xf32>
    %19 = tpu.matmul %5, %18, %cst_17 {dimension_numbers = #tpu.dot_dimension_numbers<[1], [0], [0], [1], [0, 0, 1, 1], [], []>} : vector<8x16xf32>, vector<16x128xf32>, vector<8x128xf32> -> vector<8x128xf32>
    %c32 = arith.constant 32 : index
    %c0_18 = arith.constant 0 : index
    %20 = vector.load %arg4[%c32, %c0_18] : memref<64x128xf32, #tpu.memory_space<vmem>>, vector<8x128xf32>
    tpu.vector_store %arg4[%c32, %c0_18], %19 {strides = array<i32>} : memref<64x128xf32, #tpu.memory_space<vmem>>, vector<8x128xf32>,
    %21 = vector.extract_strided_slice %3 {offsets = [80, 0], sizes = [16, 128], strides = [1, 1]} : vector<128x128xf32> to vector<16x128xf32>
    %cst_19 = arith.constant dense<0.000000e+00> : vector<8x128xf32>
    %22 = tpu.matmul %5, %21, %cst_19 {dimension_numbers = #tpu.dot_dimension_numbers<[1], [0], [0], [1], [0, 0, 1, 1], [], []>} : vector<8x16xf32>, vector<16x128xf32>, vector<8x128xf32> -> vector<8x128xf32>
    %c40 = arith.constant 40 : index
    %c0_20 = arith.constant 0 : index
    %23 = vector.load %arg4[%c40, %c0_20] : memref<64x128xf32, #tpu.memory_space<vmem>>, vector<8x128xf32>
    tpu.vector_store %arg4[%c40, %c0_20], %22 {strides = array<i32>} : memref<64x128xf32, #tpu.memory_space<vmem>>, vector<8x128xf32>,
    %24 = vector.extract_strided_slice %3 {offsets = [96, 0], sizes = [16, 128], strides = [1, 1]} : vector<128x128xf32> to vector<16x128xf32>
    %cst_21 = arith.constant dense<0.000000e+00> : vector<8x128xf32>
    %25 = tpu.matmul %5, %24, %cst_21 {dimension_numbers = #tpu.dot_dimension_numbers<[1], [0], [0], [1], [0, 0, 1, 1], [], []>} : vector<8x16xf32>, vector<16x128xf32>, vector<8x128xf32> -> vector<8x128xf32>
    %c48 = arith.constant 48 : index
    %c0_22 = arith.constant 0 : index
    %26 = vector.load %arg4[%c48, %c0_22] : memref<64x128xf32, #tpu.memory_space<vmem>>, vector<8x128xf32>
    tpu.vector_store %arg4[%c48, %c0_22], %25 {strides = array<i32>} : memref<64x128xf32, #tpu.memory_space<vmem>>, vector<8x128xf32>,
    %27 = vector.extract_strided_slice %3 {offsets = [112, 0], sizes = [16, 128], strides = [1, 1]} : vector<128x128xf32> to vector<16x128xf32>
    %cst_23 = arith.constant dense<0.000000e+00> : vector<8x128xf32>
    %28 = tpu.matmul %5, %27, %cst_23 {dimension_numbers = #tpu.dot_dimension_numbers<[1], [0], [0], [1], [0, 0, 1, 1], [], []>} : vector<8x16xf32>, vector<16x128xf32>, vector<8x128xf32> -> vector<8x128xf32>
    %c56 = arith.constant 56 : index
    %c0_24 = arith.constant 0 : index
    %29 = vector.load %arg4[%c56, %c0_24] : memref<64x128xf32, #tpu.memory_space<vmem>>, vector<8x128xf32>
    tpu.vector_store %arg4[%c56, %c0_24], %28 {strides = array<i32>} : memref<64x128xf32, #tpu.memory_space<vmem>>, vector<8x128xf32>,
    return
  }
  func.func @transform_0(%arg0: i32) -> (i32, i32, i32, i32) {
    %c0_i32 = arith.constant 0 : i32
    %c0_i32_0 = arith.constant 0 : i32
    %c0_i32_1 = arith.constant 0 : i32
    %c0_i32_2 = arith.constant 0 : i32
    %c0_i32_3 = arith.constant 0 : i32
    return %c0_i32, %c0_i32_0, %c0_i32_1, %c0_i32_2 : i32, i32, i32, i32
  }
  func.func @transform_1(%arg0: i32) -> (i32, i32, i32) {
    %c0_i32 = arith.constant 0 : i32
    %c0_i32_0 = arith.constant 0 : i32
    %c0_i32_1 = arith.constant 0 : i32
    return %arg0, %c0_i32, %c0_i32_0 : i32, i32, i32
  }
  func.func @transform_2(%arg0: i32) -> (i32, i32) {
    %c0_i32 = arith.constant 0 : i32
    %c0_i32_0 = arith.constant 0 : i32
    return %c0_i32, %arg0 : i32, i32
  }
  func.func @transform_3(%arg0: i32) -> (i32, i32) {
    %c0_i32 = arith.constant 0 : i32
    %c0_i32_0 = arith.constant 0 : i32
    return %c0_i32, %arg0 : i32, i32
  }
}

</mosaic_0001>

<llo_original>
// kernel: tpu_custom_call.1
$region0: #{tpu_custom_call.1}
  #allocation0 [shape = 'u32[]', space=smem, size = 0x4, offset = 0x4, fixed_abs, tag = 'smem constant byte address 0x4 - core index']
  #allocation1 [shape = 'u32[144,128]{1,0:T(1,128)}', space=vmem, size = 0x12000, scoped, tag = 'internal scratch']
  %s0 = inlined_call_operand.hbm [shape: f32[2,4,16,16], index: 0, kind: input, shape index: {}]
  %s1 = inlined_call_operand.hbm [shape: f32[4,8,16], index: 1, kind: input, shape index: {}]
  %s2 = inlined_call_operand.hbm [shape: f32[16,512], index: 2, kind: input, shape index: {}]
  %s3 = inlined_call_operand.hbm [shape: f32[64,512], index: 3, kind: output, shape index: {}]
  %s4 = sld [smem:[#allocation0]]
  $region57: #{tpu_custom_call.1} parent=0
    _
  %s6 = ssub.s32 1, %s4
  %s7 = scalar_select 0, %s6, %s4
  $region1: #{tpu_custom_call.1} parent=0
    #allocation2 [shape = 'u8[65536]{0}', space=vmem, size = 0x10000, scoped, tag = 'input window, operand 0, single buffered']
    #allocation3 [shape = 's32[2]{0}', space=sflag, size = 0x8, scoped, tag = 'scoped memory for tpu_custom_call.1']
    #allocation4 [shape = 's32[2]{0}', space=sflag, size = 0x8, scoped, tag = 'scoped memory for tpu_custom_call.1']
    #allocation5 [shape = 'u8[8192]{0}', space=vmem, size = 0x2000, scoped, tag = 'input window, operand 1']
    #allocation6 [shape = 's32[2]{0}', space=sflag, size = 0x8, scoped, tag = 'scoped memory for tpu_custom_call.1']
    #allocation7 [shape = 'u8[16384]{0}', space=vmem, size = 0x4000, scoped, tag = 'input window, operand 2']
    #allocation8 [shape = 'u8[65536]{0}', space=vmem, size = 0x10000, scoped, tag = 'output window, operand 0']
    %8 = vsyncpa [#allocation3], 0
    %9 = vsyncpa [#allocation6], 0
    %s10 = scalar_lea.sflag [#allocation6], 1
    %11 = vsyncpa %s10, 0
    %12 = vsyncpa [#allocation4], 0
    %s13 = scalar_lea.sflag [#allocation4], 1
    %14 = vsyncpa %s13, 0
    loop: start=0, step=1, limit=6
    $region2: #{tpu_custom_call.1} parent=1 // loop_pre_header
      _
    $region3: #{tpu_custom_call.1} parent=1 // loop_header
      %s16 = sphi 0, %s20
      %p17 = scmp.ge.s32.totalorder %s16, 6
      %s24 = sphi 0, %s24
      %s26 = sphi 0, %s24
      %s27 = sphi 0, %s26
      %s41 = sphi 0, %s27
      %s47 = sphi 0, %s49
      %s50 = sphi 0, %s47
      %s51 = sphi 0, %s50
      %s67 = sphi 0, %s51
      %s73 = sphi 0, %s75
      %s76 = sphi 0, %s73
      %s77 = sphi 0, %s76
      %s93 = sphi 0, %s77
      %s99 = sphi 0, %s101
      %s102 = sphi 0, %s99
      %s103 = sphi 0, %s102
      %s119 = sphi 0, %s103
    $region4: #{tpu_custom_call.1} parent=1 // loop_header_branch
      %19 = sbr.rel (%p17) target = $region8
    $region5: #{tpu_custom_call.1} parent=1 // loop_body
      %s21 = ssub.s32 %s16, 1
      %s22 = ssub.s32 %s16, 2
      %s23 = sadd.s32 %s16, 1
      %s25 = sadd.s32 %s24, 1
      %p28 = scmp.eq.s32.totalorder %s16, 3
      %p29 = scmp.ne.s32.totalorder %s24, %s26
      %p30 = scmp.eq.s32.totalorder %s16, 0
      %p31 = por %p29, %p30
      %p32 = scmp.ne.s32.totalorder %s24, %s26
      %p33 = scmp.eq.s32.totalorder %s21, 3
      %p34 = por %p32, %p33
      %p35 = scmp.ne.s32.totalorder %s26, %s27
      %p36 = scmp.eq.s32.totalorder %s21, 0
      %p37 = por %p35, %p36
      %p38 = scmp.ne.s32.totalorder %s26, %s27
      %p39 = scmp.eq.s32.totalorder %s22, 3
      %p40 = por %p38, %p39
      %p42 = scmp.ne.s32.totalorder %s27, %s41
      %p43 = scmp.eq.s32.totalorder %s22, 0
      %p44 = por %p42, %p43
      %s45 = ssub.s32 %s16, %s23
      %p46 = scmp.eq.s32.totalorder %s45, 0
      %s48 = sadd.s32 %s47, 1
      %s49 = scalar_select %p46, %s47, %s48
      %p52 = pneg %p46
      %p53 = scmp.eq.s32.totalorder %s16, 3
      %p54 = por %p52, %p53
      %p55 = scmp.ne.s32.totalorder %s47, %s50
      %p56 = scmp.eq.s32.totalorder %s16, 0
      %p57 = por %p55, %p56
      %p58 = scmp.ne.s32.totalorder %s47, %s50
      %p59 = scmp.eq.s32.totalorder %s21, 3
      %p60 = por %p58, %p59
      %p61 = scmp.ne.s32.totalorder %s50, %s51
      %p62 = scmp.eq.s32.totalorder %s21, 0
      %p63 = por %p61, %p62
      %p64 = scmp.ne.s32.totalorder %s50, %s51
      %p65 = scmp.eq.s32.totalorder %s22, 3
      %p66 = por %p64, %p65
      %p68 = scmp.ne.s32.totalorder %s51, %s67
      %p69 = scmp.eq.s32.totalorder %s22, 0
      %p70 = por %p68, %p69
      %s71 = ssub.s32 %s16, %s23
      %p72 = scmp.eq.s32.totalorder %s71, 0
      %s74 = sadd.s32 %s73, 1
      %s75 = scalar_select %p72, %s73, %s74
      %p78 = pneg %p72
      %p79 = scmp.eq.s32.totalorder %s16, 3
      %p80 = por %p78, %p79
      %p81 = scmp.ne.s32.totalorder %s73, %s76
      %p82 = scmp.eq.s32.totalorder %s16, 0
      %p83 = por %p81, %p82
      %p84 = scmp.ne.s32.totalorder %s73, %s76
      %p85 = scmp.eq.s32.totalorder %s21, 3
      %p86 = por %p84, %p85
      %p87 = scmp.ne.s32.totalorder %s76, %s77
      %p88 = scmp.eq.s32.totalorder %s21, 0
      %p89 = por %p87, %p88
      %p90 = scmp.ne.s32.totalorder %s76, %s77
      %p91 = scmp.eq.s32.totalorder %s22, 3
      %p92 = por %p90, %p91
      %p94 = scmp.ne.s32.totalorder %s77, %s93
      %p95 = scmp.eq.s32.totalorder %s22, 0
      %p96 = por %p94, %p95
      %s97 = ssub.s32 %s16, %s23
      %p98 = scmp.eq.s32.totalorder %s97, 0
      %s100 = sadd.s32 %s99, 1
      %s101 = scalar_select %p98, %s99, %s100
      %p104 = pneg %p98
      %p105 = scmp.eq.s32.totalorder %s16, 3
      %p106 = por %p104, %p105
      %p107 = scmp.ne.s32.totalorder %s99, %s102
      %p108 = scmp.eq.s32.totalorder %s16, 0
      %p109 = por %p107, %p108
      %p110 = scmp.ne.s32.totalorder %s99, %s102
      %p111 = scmp.eq.s32.totalorder %s21, 3
      %p112 = por %p110, %p111
      %p113 = scmp.ne.s32.totalorder %s102, %s103
      %p114 = scmp.eq.s32.totalorder %s21, 0
      %p115 = por %p113, %p114
      %p116 = scmp.ne.s32.totalorder %s102, %s103
      %p117 = scmp.eq.s32.totalorder %s22, 3
      %p118 = por %p116, %p117
      %p120 = scmp.ne.s32.totalorder %s103, %s119
      %p121 = scmp.eq.s32.totalorder %s22, 0
      %p122 = por %p120, %p121
      %p123 = scmp.le.s32.totalorder 1, %s16
      %p124 = scmp.lt.s32.totalorder %s16, 5
      %p125 = pnand %p123, %p124
      %p126 = pneg %p125
      // Predicated region
      $region9: #{tpu_custom_call.1} parent=5 // pred_check
        _
      $region10: #{tpu_custom_call.1} parent=5 // pred_check_branch
        %128 = sbr.rel (%p125) target = $region12
      $region11: #{tpu_custom_call.1} parent=5 // pred_region
        %s129 = ssub.s32 %s16, 1
        // Predicated region
        $region13: #{tpu_custom_call.1} parent=11 // pred_check
          %p130 = pneg %p37
        $region14: #{tpu_custom_call.1} parent=11 // pred_check_branch
          %132 = sbr.rel (%p130) target = $region16
        $region15: #{tpu_custom_call.1} parent=11 // pred_region
          %s134 = ssub.s32 2048, 2048
          %135 = vsyncadd [#allocation3], %s134
          %s136 = sshll.u32 [#allocation2], 4
          %s137 = int_to_ptr.vmem [resolvable:$true] %s136
          %142 = dma.hbm_to_vmem [thread:$0]  %s0, 2048, %s137, [#allocation3], 128, 128, 8
        $region16: #{tpu_custom_call.1} parent=11 // pred_fallthru
          _
      $region12: #{tpu_custom_call.1} parent=5 // pred_fallthru
        _
      %p143 = scmp.lt.s32.totalorder %s16, 4
      // Predicated region
      $region17: #{tpu_custom_call.1} parent=5 // pred_check
        %p144 = pneg %p143
      $region18: #{tpu_custom_call.1} parent=5 // pred_check_branch
        %146 = sbr.rel (%p144) target = $region20
      $region19: #{tpu_custom_call.1} parent=5 // pred_region
        // Predicated region
        $region21: #{tpu_custom_call.1} parent=19 // pred_check
          %p147 = pneg %p57
        $region22: #{tpu_custom_call.1} parent=19 // pred_check_branch
          %149 = sbr.rel (%p147) target = $region24
        $region23: #{tpu_custom_call.1} parent=19 // pred_region
          %s150 = sand.u32 %s16, 1
          %s151 = scalar_lea.sflag [#allocation6], %s150
          %s152 = sand.u32 %s47, 1
          %s153 = smul.addr %s152, 8
          %s154 = scalar_lea.vmem [#allocation5], %s153
          %s156 = ssub.s32 128, 128
          %157 = vsyncadd %s151, %s156
          %s158 = smul.addr %s16, 128
          %s159 = scalar_lea.hbm %s1, %s158
          %s161 = sshll.u32 %s154, 4
          %s162 = int_to_ptr.vmem [resolvable:$true] %s161
          %164 = dma.hbm_to_vmem [thread:$0]  %s159, 128, %s162, %s151
        $region24: #{tpu_custom_call.1} parent=19 // pred_fallthru
          _
        // Predicated region
        $region25: #{tpu_custom_call.1} parent=19 // pred_check
          %p165 = pneg %p83
        $region26: #{tpu_custom_call.1} parent=19 // pred_check_branch
          %167 = sbr.rel (%p165) target = $region28
        $region27: #{tpu_custom_call.1} parent=19 // pred_region
          %s168 = sand.u32 %s16, 1
          %s169 = scalar_lea.sflag [#allocation6], %s168
          %s170 = sand.u32 %s73, 1
          %s171 = smul.addr %s170, 16
          %s172 = scalar_lea.vmem [#allocation7], %s171
          %s174 = ssub.s32 256, 256
          %175 = vsyncadd %s169, %s174
          %s176 = smul.addr %s16, 128
          %s177 = scalar_lea.hbm %s2, %s176
          %s178 = sshll.u32 %s172, 4
          %s179 = int_to_ptr.vmem [resolvable:$true] %s178
          %184 = dma.hbm_to_vmem [thread:$0]  %s177, 256, %s179, %s169, 512, 128, 8
        $region28: #{tpu_custom_call.1} parent=19 // pred_fallthru
          _
      $region20: #{tpu_custom_call.1} parent=5 // pred_fallthru
        _
      %p185 = scmp.le.s32.totalorder 1, %s16
      %p186 = scmp.lt.s32.totalorder %s16, 5
      %p187 = pnand %p185, %p186
      %p188 = pneg %p187
      // Predicated region
      $region29: #{tpu_custom_call.1} parent=5 // pred_check
        _
      $region30: #{tpu_custom_call.1} parent=5 // pred_check_branch
        %190 = sbr.rel (%p187) target = $region32
      $region31: #{tpu_custom_call.1} parent=5 // pred_region
        %s191 = ssub.s32 %s16, 1
        // Predicated region
        $region33: #{tpu_custom_call.1} parent=31 // pred_check
          %p192 = pneg %p37
        $region34: #{tpu_custom_call.1} parent=31 // pred_check_branch
          %194 = sbr.rel (%p192) target = $region36
        $region35: #{tpu_custom_call.1} parent=31 // pred_region
          %195 = dma.done [#allocation3], 2048
        $region36: #{tpu_custom_call.1} parent=31 // pred_fallthru
          _
        %s196 = sand.u32 %s21, 1
        %s197 = scalar_lea.sflag [#allocation6], %s196
        %s198 = sand.u32 %s50, 1
        %s199 = smul.addr %s198, 8
        %s200 = scalar_lea.vmem [#allocation5], %s199
        // Predicated region
        $region37: #{tpu_custom_call.1} parent=31 // pred_check
          %p201 = pneg %p63
        $region38: #{tpu_custom_call.1} parent=31 // pred_check_branch
          %203 = sbr.rel (%p201) target = $region40
        $region39: #{tpu_custom_call.1} parent=31 // pred_region
          %204 = dma.done %s197, 128
        $region40: #{tpu_custom_call.1} parent=31 // pred_fallthru
          _
        %s205 = sand.u32 %s21, 1
        %s206 = scalar_lea.sflag [#allocation6], %s205
        %s207 = sand.u32 %s76, 1
        %s208 = smul.addr %s207, 16
        %s209 = scalar_lea.vmem [#allocation7], %s208
        // Predicated region
        $region41: #{tpu_custom_call.1} parent=31 // pred_check
          %p210 = pneg %p89
        $region42: #{tpu_custom_call.1} parent=31 // pred_check_branch
          %212 = sbr.rel (%p210) target = $region44
        $region43: #{tpu_custom_call.1} parent=31 // pred_region
          %213 = dma.done %s206, 256
        $region44: #{tpu_custom_call.1} parent=31 // pred_fallthru
          _
        %p214 = pneg %p37
        %p215 = pneg %p34
        %s216 = sand.u32 %s21, 1
        %s217 = scalar_lea.sflag [#allocation6], %s216
        %s218 = sand.u32 %s50, 1
        %s219 = smul.addr %s218, 8
        %s220 = scalar_lea.vmem [#allocation5], %s219
        %p221 = pneg %p63
        %p222 = pneg %p60
        %s223 = sand.u32 %s21, 1
        %s224 = scalar_lea.sflag [#allocation6], %s223
        %s225 = sand.u32 %s76, 1
        %s226 = smul.addr %s225, 16
        %s227 = scalar_lea.vmem [#allocation7], %s226
        %p228 = pneg %p89
        %p229 = pneg %p86
        %p230 = pneg %p115
        %p231 = pneg %p112
        %s232 = sand.u32 %s102, 1
        %s233 = scalar_lea.sflag [#allocation4], %s232
        %s234 = sand.u32 %s102, 1
        %s235 = smul.addr %s234, 64
        %s236 = scalar_lea.vmem [#allocation8], %s235
        %v237 = vld [vmem:[#allocation2] sm:$0xff]
        %v238 = vld [vmem:[#allocation2 + $0x8] sm:$0xff]
        %v239 = vld [vmem:[#allocation2 + $0x10] sm:$0xff]
        %v240 = vld [vmem:[#allocation2 + $0x18] sm:$0xff]
        %v241 = vld [vmem:[#allocation2 + $0x20] sm:$0xff]
        %v242 = vld [vmem:[#allocation2 + $0x28] sm:$0xff]
        %v243 = vld [vmem:[#allocation2 + $0x30] sm:$0xff]
        %v244 = vld [vmem:[#allocation2 + $0x38] sm:$0xff]
        %v245 = vld [vmem:[#allocation2 + $0x40] sm:$0xff]
        %v246 = vld [vmem:[#allocation2 + $0x48] sm:$0xff]
        %v247 = vld [vmem:[#allocation2 + $0x50] sm:$0xff]
        %v248 = vld [vmem:[#allocation2 + $0x58] sm:$0xff]
        %v249 = vld [vmem:[#allocation2 + $0x60] sm:$0xff]
        %v250 = vld [vmem:[#allocation2 + $0x68] sm:$0xff]
        %v251 = vld [vmem:[#allocation2 + $0x70] sm:$0xff]
        %v252 = vld [vmem:[#allocation2 + $0x78] sm:$0xff]
        %v253 = vld [vmem:[%s209] sm:$0xff]
        %v254 = vld [vmem:[%s209 + $0x8] sm:$0xff]
        %vm255 = vcmask 130048
        %v257 = vsel %vm255, %v237, 0
        %v260 = vsel %vm255, %v238, 0
        %v263 = vsel %vm255, %v239, 0
        %v266 = vsel %vm255, %v240, 0
        %v269 = vsel %vm255, %v241, 0
        %v272 = vsel %vm255, %v242, 0
        %v275 = vsel %vm255, %v243, 0
        %v278 = vsel %vm255, %v244, 0
        %v281 = vsel %vm255, %v245, 0
        %v284 = vsel %vm255, %v246, 0
        %v287 = vsel %vm255, %v247, 0
        %v290 = vsel %vm255, %v248, 0
        %v293 = vsel %vm255, %v249, 0
        %v296 = vsel %vm255, %v250, 0
        %v299 = vsel %vm255, %v251, 0
        %v302 = vsel %vm255, %v252, 0
        %304 = vmatprep.subr.mxu0 0.0
        %305 = vmatpush1.msra.mxu0 %v253
        %306 = vmatprep.subr.mxu0 0.0
        %307 = vmatpush1.msra.mxu0 %v254
        %308 = vmatprep.subr.mxu0 0.0
        %309 = vmatpush1.msra.mxu0 0.0
        %310 = vmatprep.subr.mxu0 0.0
        %311 = vmatpush1.msra.mxu0 0.0
        %312 = vmatprep.subr.mxu0 0.0
        %313 = vmatpush1.msra.mxu0 0.0
        %314 = vmatprep.subr.mxu0 0.0
        %315 = vmatpush1.msra.mxu0 0.0
        %316 = vmatprep.subr.mxu0 0.0
        %317 = vmatpush1.msra.mxu0 0.0
        %318 = vmatprep.subr.mxu0 0.0
        %319 = vmatpush1.msra.mxu0 0.0
        %320 = vmatprep.subr.mxu0 0.0
        %321 = vmatpush1.msra.mxu0 0.0
        %322 = vmatprep.subr.mxu0 0.0
        %323 = vmatpush1.msra.mxu0 0.0
        %324 = vmatprep.subr.mxu0 0.0
        %325 = vmatpush1.msra.mxu0 0.0
        %326 = vmatprep.subr.mxu0 0.0
        %327 = vmatpush1.msra.mxu0 0.0
        %328 = vmatprep.subr.mxu0 0.0
        %329 = vmatpush1.msra.mxu0 0.0
        %330 = vmatprep.subr.mxu0 0.0
        %331 = vmatpush1.msra.mxu0 0.0
        %332 = vmatprep.subr.mxu0 0.0
        %333 = vmatpush1.msra.mxu0 0.0
        %334 = vmatprep.subr.mxu0 0.0
        %335 = vmatpush1.msra.mxu0 0.0
        %336 = vmatprep.subr.mxu0 0.0
        %337 = vmatpush1.msra.mxu0 0.0
        %338 = vmatprep.subr.mxu0 0.0
        %339 = vmatpush1.msra.mxu0 0.0
        %340 = vmatprep.subr.mxu0 0.0
        %341 = vmatpush1.msra.mxu0 0.0
        %342 = vmatprep.subr.mxu0 0.0
        %343 = vmatpush1.msra.mxu0 0.0
        %344 = vmatprep.subr.mxu0 0.0
        %345 = vmatpush1.msra.mxu0 0.0
        %346 = vmatprep.subr.mxu0 0.0
        %347 = vmatpush1.msra.mxu0 0.0
        %348 = vmatprep.subr.mxu0 0.0
        %349 = vmatpush1.msra.mxu0 0.0
        %350 = vmatprep.subr.mxu0 0.0
        %351 = vmatpush1.msra.mxu0 0.0
        %352 = vmatprep.subr.mxu0 0.0
        %353 = vmatpush1.msra.mxu0 0.0
        %354 = vmatprep.subr.mxu0 0.0
        %355 = vmatpush1.msra.mxu0 0.0
        %356 = vmatprep.subr.mxu0 0.0
        %357 = vmatpush1.msra.mxu0 0.0
        %358 = vmatprep.subr.mxu0 0.0
        %359 = vmatpush1.msra.mxu0 0.0
        %360 = vmatprep.subr.mxu0 0.0
        %361 = vmatpush1.msra.mxu0 0.0
        %362 = vmatprep.subr.mxu0 0.0
        %363 = vmatpush1.msra.mxu0 0.0
        %364 = vmatprep.subr.mxu0 0.0
        %365 = vmatpush1.msra.mxu0 0.0
        %366 = vmatprep.subr.mxu0 0.0
        %367 = vmatpush1.msra.mxu0 0.0
        %368 = vmatprep.mubr.f32.mxu0 0.0
        %369 = vmatmul.mubr.f32.gmra.mrb[0].mxu0 %v257
        %v370 = vpop.f32.mrb[0].mxu0
        %v371 = vadd.f32 0.0, %v370
        %v372 = vpop.f32.mrb[0].mxu0
        %373 = vmatprep.mubr.f32.mxu0 0.0
        %374 = vmatmul.mubr.f32.gmra.mrb[0].mxu0 %v260
        %v375 = vpop.f32.mrb[0].mxu0
        %v376 = vadd.f32 0.0, %v375
        %v377 = vpop.f32.mrb[0].mxu0
        %378 = vmatprep.mubr.f32.mxu0 0.0
        %379 = vmatmul.mubr.f32.gmra.mrb[0].mxu0 %v263
        %v380 = vpop.f32.mrb[0].mxu0
        %v381 = vadd.f32 0.0, %v380
        %v382 = vpop.f32.mrb[0].mxu0
        %383 = vmatprep.mubr.f32.mxu0 0.0
        %384 = vmatmul.mubr.f32.gmra.mrb[0].mxu0 %v266
        %v385 = vpop.f32.mrb[0].mxu0
        %v386 = vadd.f32 0.0, %v385
        %v387 = vpop.f32.mrb[0].mxu0
        %388 = vmatprep.mubr.f32.mxu0 0.0
        %389 = vmatmul.mubr.f32.gmra.mrb[0].mxu0 %v269
        %v390 = vpop.f32.mrb[0].mxu0
        %v391 = vadd.f32 0.0, %v390
        %v392 = vpop.f32.mrb[0].mxu0
        %393 = vmatprep.mubr.f32.mxu0 0.0
        %394 = vmatmul.mubr.f32.gmra.mrb[0].mxu0 %v272
        %v395 = vpop.f32.mrb[0].mxu0
        %v396 = vadd.f32 0.0, %v395
        %v397 = vpop.f32.mrb[0].mxu0
        %398 = vmatprep.mubr.f32.mxu0 0.0
        %399 = vmatmul.mubr.f32.gmra.mrb[0].mxu0 %v275
        %v400 = vpop.f32.mrb[0].mxu0
        %v401 = vadd.f32 0.0, %v400
        %v402 = vpop.f32.mrb[0].mxu0
        %403 = vmatprep.mubr.f32.mxu0 0.0
        %404 = vmatmul.mubr.f32.gmra.mrb[0].mxu0 %v278
        %v405 = vpop.f32.mrb[0].mxu0
        %v406 = vadd.f32 0.0, %v405
        %v407 = vpop.f32.mrb[0].mxu0
        %408 = vmatprep.mubr.f32.mxu0 0.0
        %409 = vmatmul.mubr.f32.gmra.mrb[0].mxu0 %v281
        %v410 = vpop.f32.mrb[0].mxu0
        %v411 = vadd.f32 0.0, %v410
        %v412 = vpop.f32.mrb[0].mxu0
        %413 = vmatprep.mubr.f32.mxu0 0.0
        %414 = vmatmul.mubr.f32.gmra.mrb[0].mxu0 %v284
        %v415 = vpop.f32.mrb[0].mxu0
        %v416 = vadd.f32 0.0, %v415
        %v417 = vpop.f32.mrb[0].mxu0
        %418 = vmatprep.mubr.f32.mxu0 0.0
        %419 = vmatmul.mubr.f32.gmra.mrb[0].mxu0 %v287
        %v420 = vpop.f32.mrb[0].mxu0
        %v421 = vadd.f32 0.0, %v420
        %v422 = vpop.f32.mrb[0].mxu0
        %423 = vmatprep.mubr.f32.mxu0 0.0
        %424 = vmatmul.mubr.f32.gmra.mrb[0].mxu0 %v290
        %v425 = vpop.f32.mrb[0].mxu0
        %v426 = vadd.f32 0.0, %v425
        %v427 = vpop.f32.mrb[0].mxu0
        %428 = vmatprep.mubr.f32.mxu0 0.0
        %429 = vmatmul.mubr.f32.gmra.mrb[0].mxu0 %v293
        %v430 = vpop.f32.mrb[0].mxu0
        %v431 = vadd.f32 0.0, %v430
        %v432 = vpop.f32.mrb[0].mxu0
        %433 = vmatprep.mubr.f32.mxu0 0.0
        %434 = vmatmul.mubr.f32.gmra.mrb[0].mxu0 %v296
        %v435 = vpop.f32.mrb[0].mxu0
        %v436 = vadd.f32 0.0, %v435
        %v437 = vpop.f32.mrb[0].mxu0
        %438 = vmatprep.mubr.f32.mxu0 0.0
        %439 = vmatmul.mubr.f32.gmra.mrb[0].mxu0 %v299
        %v440 = vpop.f32.mrb[0].mxu0
        %v441 = vadd.f32 0.0, %v440
        %v442 = vpop.f32.mrb[0].mxu0
        %443 = vmatprep.mubr.f32.mxu0 0.0
        %444 = vmatmul.mubr.f32.gmra.mrb[0].mxu0 %v302
        %v445 = vpop.f32.mrb[0].mxu0
        %v446 = vadd.f32 0.0, %v445
        %v447 = vpop.f32.mrb[0].mxu0
        %448 = vdwg.mxu0
        %v449 = vld [vmem:[%s200] sm:$0xff]
        %v451 = vsel %vm255, %v449, 0
        %453 = vmatprep.subr.mxu0 0.0
        %454 = vmatpush1.msra.mxu0 %v371
        %455 = vmatprep.subr.mxu0 0.0
        %456 = vmatpush1.msra.mxu0 %v376
        %457 = vmatprep.subr.mxu0 0.0
        %458 = vmatpush1.msra.mxu0 0.0
        %459 = vmatprep.subr.mxu0 0.0
        %460 = vmatpush1.msra.mxu0 0.0
        %461 = vmatprep.subr.mxu0 0.0
        %462 = vmatpush1.msra.mxu0 0.0
        %463 = vmatprep.subr.mxu0 0.0
        %464 = vmatpush1.msra.mxu0 0.0
        %465 = vmatprep.subr.mxu0 0.0
        %466 = vmatpush1.msra.mxu0 0.0
        %467 = vmatprep.subr.mxu0 0.0
        %468 = vmatpush1.msra.mxu0 0.0
        %469 = vmatprep.subr.mxu0 0.0
        %470 = vmatpush1.msra.mxu0 0.0
        %471 = vmatprep.subr.mxu0 0.0
        %472 = vmatpush1.msra.mxu0 0.0
        %473 = vmatprep.subr.mxu0 0.0
        %474 = vmatpush1.msra.mxu0 0.0
        %475 = vmatprep.subr.mxu0 0.0
        %476 = vmatpush1.msra.mxu0 0.0
        %477 = vmatprep.subr.mxu0 0.0
        %478 = vmatpush1.msra.mxu0 0.0
        %479 = vmatprep.subr.mxu0 0.0
        %480 = vmatpush1.msra.mxu0 0.0
        %481 = vmatprep.subr.mxu0 0.0
        %482 = vmatpush1.msra.mxu0 0.0
        %483 = vmatprep.subr.mxu0 0.0
        %484 = vmatpush1.msra.mxu0 0.0
        %485 = vmatprep.subr.mxu0 0.0
        %486 = vmatpush1.msra.mxu0 0.0
        %487 = vmatprep.subr.mxu0 0.0
        %488 = vmatpush1.msra.mxu0 0.0
        %489 = vmatprep.subr.mxu0 0.0
        %490 = vmatpush1.msra.mxu0 0.0
        %491 = vmatprep.subr.mxu0 0.0
        %492 = vmatpush1.msra.mxu0 0.0
        %493 = vmatprep.subr.mxu0 0.0
        %494 = vmatpush1.msra.mxu0 0.0
        %495 = vmatprep.subr.mxu0 0.0
        %496 = vmatpush1.msra.mxu0 0.0
        %497 = vmatprep.subr.mxu0 0.0
        %498 = vmatpush1.msra.mxu0 0.0
        %499 = vmatprep.subr.mxu0 0.0
        %500 = vmatpush1.msra.mxu0 0.0
        %501 = vmatprep.subr.mxu0 0.0
        %502 = vmatpush1.msra.mxu0 0.0
        %503 = vmatprep.subr.mxu0 0.0
        %504 = vmatpush1.msra.mxu0 0.0
        %505 = vmatprep.subr.mxu0 0.0
        %506 = vmatpush1.msra.mxu0 0.0
        %507 = vmatprep.subr.mxu0 0.0
        %508 = vmatpush1.msra.mxu0 0.0
        %509 = vmatprep.subr.mxu0 0.0
        %510 = vmatpush1.msra.mxu0 0.0
        %511 = vmatprep.subr.mxu0 0.0
        %512 = vmatpush1.msra.mxu0 0.0
        %513 = vmatprep.subr.mxu0 0.0
        %514 = vmatpush1.msra.mxu0 0.0
        %515 = vmatprep.subr.mxu0 0.0
        %516 = vmatpush1.msra.mxu0 0.0
        %517 = vmatprep.mubr.f32.mxu0 0.0
        %518 = vmatmul.mubr.f32.gmra.mrb[0].mxu0 %v451
        %v519 = vpop.f32.mrb[0].mxu0
        %v520 = vadd.f32 0.0, %v519
        %v521 = vpop.f32.mrb[0].mxu0
        %522 = vdwg.mxu0
        %523 = vst [vmem:[%s236] sm:$0xff] %v520
        %524 = vmatprep.subr.mxu0 0.0
        %525 = vmatpush1.msra.mxu0 %v381
        %526 = vmatprep.subr.mxu0 0.0
        %527 = vmatpush1.msra.mxu0 %v386
        %528 = vmatprep.subr.mxu0 0.0
        %529 = vmatpush1.msra.mxu0 0.0
        %530 = vmatprep.subr.mxu0 0.0
        %531 = vmatpush1.msra.mxu0 0.0
        %532 = vmatprep.subr.mxu0 0.0
        %533 = vmatpush1.msra.mxu0 0.0
        %534 = vmatprep.subr.mxu0 0.0
        %535 = vmatpush1.msra.mxu0 0.0
        %536 = vmatprep.subr.mxu0 0.0
        %537 = vmatpush1.msra.mxu0 0.0
        %538 = vmatprep.subr.mxu0 0.0
        %539 = vmatpush1.msra.mxu0 0.0
        %540 = vmatprep.subr.mxu0 0.0
        %541 = vmatpush1.msra.mxu0 0.0
        %542 = vmatprep.subr.mxu0 0.0
        %543 = vmatpush1.msra.mxu0 0.0
        %544 = vmatprep.subr.mxu0 0.0
        %545 = vmatpush1.msra.mxu0 0.0
        %546 = vmatprep.subr.mxu0 0.0
        %547 = vmatpush1.msra.mxu0 0.0
        %548 = vmatprep.subr.mxu0 0.0
        %549 = vmatpush1.msra.mxu0 0.0
        %550 = vmatprep.subr.mxu0 0.0
        %551 = vmatpush1.msra.mxu0 0.0
        %552 = vmatprep.subr.mxu0 0.0
        %553 = vmatpush1.msra.mxu0 0.0
        %554 = vmatprep.subr.mxu0 0.0
        %555 = vmatpush1.msra.mxu0 0.0
        %556 = vmatprep.subr.mxu0 0.0
        %557 = vmatpush1.msra.mxu0 0.0
        %558 = vmatprep.subr.mxu0 0.0
        %559 = vmatpush1.msra.mxu0 0.0
        %560 = vmatprep.subr.mxu0 0.0
        %561 = vmatpush1.msra.mxu0 0.0
        %562 = vmatprep.subr.mxu0 0.0
        %563 = vmatpush1.msra.mxu0 0.0
        %564 = vmatprep.subr.mxu0 0.0
        %565 = vmatpush1.msra.mxu0 0.0
        %566 = vmatprep.subr.mxu0 0.0
        %567 = vmatpush1.msra.mxu0 0.0
        %568 = vmatprep.subr.mxu0 0.0
        %569 = vmatpush1.msra.mxu0 0.0
        %570 = vmatprep.subr.mxu0 0.0
        %571 = vmatpush1.msra.mxu0 0.0
        %572 = vmatprep.subr.mxu0 0.0
        %573 = vmatpush1.msra.mxu0 0.0
        %574 = vmatprep.subr.mxu0 0.0
        %575 = vmatpush1.msra.mxu0 0.0
        %576 = vmatprep.subr.mxu0 0.0
        %577 = vmatpush1.msra.mxu0 0.0
        %578 = vmatprep.subr.mxu0 0.0
        %579 = vmatpush1.msra.mxu0 0.0
        %580 = vmatprep.subr.mxu0 0.0
        %581 = vmatpush1.msra.mxu0 0.0
        %582 = vmatprep.subr.mxu0 0.0
        %583 = vmatpush1.msra.mxu0 0.0
        %584 = vmatprep.subr.mxu0 0.0
        %585 = vmatpush1.msra.mxu0 0.0
        %586 = vmatprep.subr.mxu0 0.0
        %587 = vmatpush1.msra.mxu0 0.0
        %588 = vmatprep.mubr.f32.mxu0 0.0
        %589 = vmatmul.mubr.f32.gmra.mrb[0].mxu0 %v451
        %v590 = vpop.f32.mrb[0].mxu0
        %v591 = vadd.f32 0.0, %v590
        %v592 = vpop.f32.mrb[0].mxu0
        %593 = vdwg.mxu0
        %594 = vst [vmem:[%s236 + $0x8] sm:$0xff] %v591
        %595 = vmatprep.subr.mxu0 0.0
        %596 = vmatpush1.msra.mxu0 %v391
        %597 = vmatprep.subr.mxu0 0.0
        %598 = vmatpush1.msra.mxu0 %v396
        %599 = vmatprep.subr.mxu0 0.0
        %600 = vmatpush1.msra.mxu0 0.0
        %601 = vmatprep.subr.mxu0 0.0
        %602 = vmatpush1.msra.mxu0 0.0
        %603 = vmatprep.subr.mxu0 0.0
        %604 = vmatpush1.msra.mxu0 0.0
        %605 = vmatprep.subr.mxu0 0.0
        %606 = vmatpush1.msra.mxu0 0.0
        %607 = vmatprep.subr.mxu0 0.0
        %608 = vmatpush1.msra.mxu0 0.0
        %609 = vmatprep.subr.mxu0 0.0
        %610 = vmatpush1.msra.mxu0 0.0
        %611 = vmatprep.subr.mxu0 0.0
        %612 = vmatpush1.msra.mxu0 0.0
        %613 = vmatprep.subr.mxu0 0.0
        %614 = vmatpush1.msra.mxu0 0.0
        %615 = vmatprep.subr.mxu0 0.0
        %616 = vmatpush1.msra.mxu0 0.0
        %617 = vmatprep.subr.mxu0 0.0
        %618 = vmatpush1.msra.mxu0 0.0
        %619 = vmatprep.subr.mxu0 0.0
        %620 = vmatpush1.msra.mxu0 0.0
        %621 = vmatprep.subr.mxu0 0.0
        %622 = vmatpush1.msra.mxu0 0.0
        %623 = vmatprep.subr.mxu0 0.0
        %624 = vmatpush1.msra.mxu0 0.0
        %625 = vmatprep.subr.mxu0 0.0
        %626 = vmatpush1.msra.mxu0 0.0
        %627 = vmatprep.subr.mxu0 0.0
        %628 = vmatpush1.msra.mxu0 0.0
        %629 = vmatprep.subr.mxu0 0.0
        %630 = vmatpush1.msra.mxu0 0.0
        %631 = vmatprep.subr.mxu0 0.0
        %632 = vmatpush1.msra.mxu0 0.0
        %633 = vmatprep.subr.mxu0 0.0
        %634 = vmatpush1.msra.mxu0 0.0
        %635 = vmatprep.subr.mxu0 0.0
        %636 = vmatpush1.msra.mxu0 0.0
        %637 = vmatprep.subr.mxu0 0.0
        %638 = vmatpush1.msra.mxu0 0.0
        %639 = vmatprep.subr.mxu0 0.0
        %640 = vmatpush1.msra.mxu0 0.0
        %641 = vmatprep.subr.mxu0 0.0
        %642 = vmatpush1.msra.mxu0 0.0
        %643 = vmatprep.subr.mxu0 0.0
        %644 = vmatpush1.msra.mxu0 0.0
        %645 = vmatprep.subr.mxu0 0.0
        %646 = vmatpush1.msra.mxu0 0.0
        %647 = vmatprep.subr.mxu0 0.0
        %648 = vmatpush1.msra.mxu0 0.0
        %649 = vmatprep.subr.mxu0 0.0
        %650 = vmatpush1.msra.mxu0 0.0
        %651 = vmatprep.subr.mxu0 0.0
        %652 = vmatpush1.msra.mxu0 0.0
        %653 = vmatprep.subr.mxu0 0.0
        %654 = vmatpush1.msra.mxu0 0.0
        %655 = vmatprep.subr.mxu0 0.0
        %656 = vmatpush1.msra.mxu0 0.0
        %657 = vmatprep.subr.mxu0 0.0
        %658 = vmatpush1.msra.mxu0 0.0
        %659 = vmatprep.mubr.f32.mxu0 0.0
        %660 = vmatmul.mubr.f32.gmra.mrb[0].mxu0 %v451
        %v661 = vpop.f32.mrb[0].mxu0
        %v662 = vadd.f32 0.0, %v661
        %v663 = vpop.f32.mrb[0].mxu0
        %664 = vdwg.mxu0
        %665 = vst [vmem:[%s236 + $0x10] sm:$0xff] %v662
        %666 = vmatprep.subr.mxu0 0.0
        %667 = vmatpush1.msra.mxu0 %v401
        %668 = vmatprep.subr.mxu0 0.0
        %669 = vmatpush1.msra.mxu0 %v406
        %670 = vmatprep.subr.mxu0 0.0
        %671 = vmatpush1.msra.mxu0 0.0
        %672 = vmatprep.subr.mxu0 0.0
        %673 = vmatpush1.msra.mxu0 0.0
        %674 = vmatprep.subr.mxu0 0.0
        %675 = vmatpush1.msra.mxu0 0.0
        %676 = vmatprep.subr.mxu0 0.0
        %677 = vmatpush1.msra.mxu0 0.0
        %678 = vmatprep.subr.mxu0 0.0
        %679 = vmatpush1.msra.mxu0 0.0
        %680 = vmatprep.subr.mxu0 0.0
        %681 = vmatpush1.msra.mxu0 0.0
        %682 = vmatprep.subr.mxu0 0.0
        %683 = vmatpush1.msra.mxu0 0.0
        %684 = vmatprep.subr.mxu0 0.0
        %685 = vmatpush1.msra.mxu0 0.0
        %686 = vmatprep.subr.mxu0 0.0
        %687 = vmatpush1.msra.mxu0 0.0
        %688 = vmatprep.subr.mxu0 0.0
        %689 = vmatpush1.msra.mxu0 0.0
        %690 = vmatprep.subr.mxu0 0.0
        %691 = vmatpush1.msra.mxu0 0.0
        %692 = vmatprep.subr.mxu0 0.0
        %693 = vmatpush1.msra.mxu0 0.0
        %694 = vmatprep.subr.mxu0 0.0
        %695 = vmatpush1.msra.mxu0 0.0
        %696 = vmatprep.subr.mxu0 0.0
        %697 = vmatpush1.msra.mxu0 0.0
        %698 = vmatprep.subr.mxu0 0.0
        %699 = vmatpush1.msra.mxu0 0.0
        %700 = vmatprep.subr.mxu0 0.0
        %701 = vmatpush1.msra.mxu0 0.0
        %702 = vmatprep.subr.mxu0 0.0
        %703 = vmatpush1.msra.mxu0 0.0
        %704 = vmatprep.subr.mxu0 0.0
        %705 = vmatpush1.msra.mxu0 0.0
        %706 = vmatprep.subr.mxu0 0.0
        %707 = vmatpush1.msra.mxu0 0.0
        %708 = vmatprep.subr.mxu0 0.0
        %709 = vmatpush1.msra.mxu0 0.0
        %710 = vmatprep.subr.mxu0 0.0
        %711 = vmatpush1.msra.mxu0 0.0
        %712 = vmatprep.subr.mxu0 0.0
        %713 = vmatpush1.msra.mxu0 0.0
        %714 = vmatprep.subr.mxu0 0.0
        %715 = vmatpush1.msra.mxu0 0.0
        %716 = vmatprep.subr.mxu0 0.0
        %717 = vmatpush1.msra.mxu0 0.0
        %718 = vmatprep.subr.mxu0 0.0
        %719 = vmatpush1.msra.mxu0 0.0
        %720 = vmatprep.subr.mxu0 0.0
        %721 = vmatpush1.msra.mxu0 0.0
        %722 = vmatprep.subr.mxu0 0.0
        %723 = vmatpush1.msra.mxu0 0.0
        %724 = vmatprep.subr.mxu0 0.0
        %725 = vmatpush1.msra.mxu0 0.0
        %726 = vmatprep.subr.mxu0 0.0
        %727 = vmatpush1.msra.mxu0 0.0
        %728 = vmatprep.subr.mxu0 0.0
        %729 = vmatpush1.msra.mxu0 0.0
        %730 = vmatprep.mubr.f32.mxu0 0.0
        %731 = vmatmul.mubr.f32.gmra.mrb[0].mxu0 %v451
        %v732 = vpop.f32.mrb[0].mxu0
        %v733 = vadd.f32 0.0, %v732
        %v734 = vpop.f32.mrb[0].mxu0
        %735 = vdwg.mxu0
        %736 = vst [vmem:[%s236 + $0x18] sm:$0xff] %v733
        %737 = vmatprep.subr.mxu0 0.0
        %738 = vmatpush1.msra.mxu0 %v411
        %739 = vmatprep.subr.mxu0 0.0
        %740 = vmatpush1.msra.mxu0 %v416
        %741 = vmatprep.subr.mxu0 0.0
        %742 = vmatpush1.msra.mxu0 0.0
        %743 = vmatprep.subr.mxu0 0.0
        %744 = vmatpush1.msra.mxu0 0.0
        %745 = vmatprep.subr.mxu0 0.0
        %746 = vmatpush1.msra.mxu0 0.0
        %747 = vmatprep.subr.mxu0 0.0
        %748 = vmatpush1.msra.mxu0 0.0
        %749 = vmatprep.subr.mxu0 0.0
        %750 = vmatpush1.msra.mxu0 0.0
        %751 = vmatprep.subr.mxu0 0.0
        %752 = vmatpush1.msra.mxu0 0.0
        %753 = vmatprep.subr.mxu0 0.0
        %754 = vmatpush1.msra.mxu0 0.0
        %755 = vmatprep.subr.mxu0 0.0
        %756 = vmatpush1.msra.mxu0 0.0
        %757 = vmatprep.subr.mxu0 0.0
        %758 = vmatpush1.msra.mxu0 0.0
        %759 = vmatprep.subr.mxu0 0.0
        %760 = vmatpush1.msra.mxu0 0.0
        %761 = vmatprep.subr.mxu0 0.0
        %762 = vmatpush1.msra.mxu0 0.0
        %763 = vmatprep.subr.mxu0 0.0
        %764 = vmatpush1.msra.mxu0 0.0
        %765 = vmatprep.subr.mxu0 0.0
        %766 = vmatpush1.msra.mxu0 0.0
        %767 = vmatprep.subr.mxu0 0.0
        %768 = vmatpush1.msra.mxu0 0.0
        %769 = vmatprep.subr.mxu0 0.0
        %770 = vmatpush1.msra.mxu0 0.0
        %771 = vmatprep.subr.mxu0 0.0
        %772 = vmatpush1.msra.mxu0 0.0
        %773 = vmatprep.subr.mxu0 0.0
        %774 = vmatpush1.msra.mxu0 0.0
        %775 = vmatprep.subr.mxu0 0.0
        %776 = vmatpush1.msra.mxu0 0.0
        %777 = vmatprep.subr.mxu0 0.0
        %778 = vmatpush1.msra.mxu0 0.0
        %779 = vmatprep.subr.mxu0 0.0
        %780 = vmatpush1.msra.mxu0 0.0
        %781 = vmatprep.subr.mxu0 0.0
        %782 = vmatpush1.msra.mxu0 0.0
        %783 = vmatprep.subr.mxu0 0.0
        %784 = vmatpush1.msra.mxu0 0.0
        %785 = vmatprep.subr.mxu0 0.0
        %786 = vmatpush1.msra.mxu0 0.0
        %787 = vmatprep.subr.mxu0 0.0
        %788 = vmatpush1.msra.mxu0 0.0
        %789 = vmatprep.subr.mxu0 0.0
        %790 = vmatpush1.msra.mxu0 0.0
        %791 = vmatprep.subr.mxu0 0.0
        %792 = vmatpush1.msra.mxu0 0.0
        %793 = vmatprep.subr.mxu0 0.0
        %794 = vmatpush1.msra.mxu0 0.0
        %795 = vmatprep.subr.mxu0 0.0
        %796 = vmatpush1.msra.mxu0 0.0
        %797 = vmatprep.subr.mxu0 0.0
        %798 = vmatpush1.msra.mxu0 0.0
        %799 = vmatprep.subr.mxu0 0.0
        %800 = vmatpush1.msra.mxu0 0.0
        %801 = vmatprep.mubr.f32.mxu0 0.0
        %802 = vmatmul.mubr.f32.gmra.mrb[0].mxu0 %v451
        %v803 = vpop.f32.mrb[0].mxu0
        %v804 = vadd.f32 0.0, %v803
        %v805 = vpop.f32.mrb[0].mxu0
        %806 = vdwg.mxu0
        %807 = vst [vmem:[%s236 + $0x20] sm:$0xff] %v804
        %808 = vmatprep.subr.mxu0 0.0
        %809 = vmatpush1.msra.mxu0 %v421
        %810 = vmatprep.subr.mxu0 0.0
        %811 = vmatpush1.msra.mxu0 %v426
        %812 = vmatprep.subr.mxu0 0.0
        %813 = vmatpush1.msra.mxu0 0.0
        %814 = vmatprep.subr.mxu0 0.0
        %815 = vmatpush1.msra.mxu0 0.0
        %816 = vmatprep.subr.mxu0 0.0
        %817 = vmatpush1.msra.mxu0 0.0
        %818 = vmatprep.subr.mxu0 0.0
        %819 = vmatpush1.msra.mxu0 0.0
        %820 = vmatprep.subr.mxu0 0.0
        %821 = vmatpush1.msra.mxu0 0.0
        %822 = vmatprep.subr.mxu0 0.0
        %823 = vmatpush1.msra.mxu0 0.0
        %824 = vmatprep.subr.mxu0 0.0
        %825 = vmatpush1.msra.mxu0 0.0
        %826 = vmatprep.subr.mxu0 0.0
        %827 = vmatpush1.msra.mxu0 0.0
        %828 = vmatprep.subr.mxu0 0.0
        %829 = vmatpush1.msra.mxu0 0.0
        %830 = vmatprep.subr.mxu0 0.0
        %831 = vmatpush1.msra.mxu0 0.0
        %832 = vmatprep.subr.mxu0 0.0
        %833 = vmatpush1.msra.mxu0 0.0
        %834 = vmatprep.subr.mxu0 0.0
        %835 = vmatpush1.msra.mxu0 0.0
        %836 = vmatprep.subr.mxu0 0.0
        %837 = vmatpush1.msra.mxu0 0.0
        %838 = vmatprep.subr.mxu0 0.0
        %839 = vmatpush1.msra.mxu0 0.0
        %840 = vmatprep.subr.mxu0 0.0
        %841 = vmatpush1.msra.mxu0 0.0
        %842 = vmatprep.subr.mxu0 0.0
        %843 = vmatpush1.msra.mxu0 0.0
        %844 = vmatprep.subr.mxu0 0.0
        %845 = vmatpush1.msra.mxu0 0.0
        %846 = vmatprep.subr.mxu0 0.0
        %847 = vmatpush1.msra.mxu0 0.0
        %848 = vmatprep.subr.mxu0 0.0
        %849 = vmatpush1.msra.mxu0 0.0
        %850 = vmatprep.subr.mxu0 0.0
        %851 = vmatpush1.msra.mxu0 0.0
        %852 = vmatprep.subr.mxu0 0.0
        %853 = vmatpush1.msra.mxu0 0.0
        %854 = vmatprep.subr.mxu0 0.0
        %855 = vmatpush1.msra.mxu0 0.0
        %856 = vmatprep.subr.mxu0 0.0
        %857 = vmatpush1.msra.mxu0 0.0
        %858 = vmatprep.subr.mxu0 0.0
        %859 = vmatpush1.msra.mxu0 0.0
        %860 = vmatprep.subr.mxu0 0.0
        %861 = vmatpush1.msra.mxu0 0.0
        %862 = vmatprep.subr.mxu0 0.0
        %863 = vmatpush1.msra.mxu0 0.0
        %864 = vmatprep.subr.mxu0 0.0
        %865 = vmatpush1.msra.mxu0 0.0
        %866 = vmatprep.subr.mxu0 0.0
        %867 = vmatpush1.msra.mxu0 0.0
        %868 = vmatprep.subr.mxu0 0.0
        %869 = vmatpush1.msra.mxu0 0.0
        %870 = vmatprep.subr.mxu0 0.0
        %871 = vmatpush1.msra.mxu0 0.0
        %872 = vmatprep.mubr.f32.mxu0 0.0
        %873 = vmatmul.mubr.f32.gmra.mrb[0].mxu0 %v451
        %v874 = vpop.f32.mrb[0].mxu0
        %v875 = vadd.f32 0.0, %v874
        %v876 = vpop.f32.mrb[0].mxu0
        %877 = vdwg.mxu0
        %878 = vst [vmem:[%s236 + $0x28] sm:$0xff] %v875
        %879 = vmatprep.subr.mxu0 0.0
        %880 = vmatpush1.msra.mxu0 %v431
        %881 = vmatprep.subr.mxu0 0.0
        %882 = vmatpush1.msra.mxu0 %v436
        %883 = vmatprep.subr.mxu0 0.0
        %884 = vmatpush1.msra.mxu0 0.0
        %885 = vmatprep.subr.mxu0 0.0
        %886 = vmatpush1.msra.mxu0 0.0
        %887 = vmatprep.subr.mxu0 0.0
        %888 = vmatpush1.msra.mxu0 0.0
        %889 = vmatprep.subr.mxu0 0.0
        %890 = vmatpush1.msra.mxu0 0.0
        %891 = vmatprep.subr.mxu0 0.0
        %892 = vmatpush1.msra.mxu0 0.0
        %893 = vmatprep.subr.mxu0 0.0
        %894 = vmatpush1.msra.mxu0 0.0
        %895 = vmatprep.subr.mxu0 0.0
        %896 = vmatpush1.msra.mxu0 0.0
        %897 = vmatprep.subr.mxu0 0.0
        %898 = vmatpush1.msra.mxu0 0.0
        %899 = vmatprep.subr.mxu0 0.0
        %900 = vmatpush1.msra.mxu0 0.0
        %901 = vmatprep.subr.mxu0 0.0
        %902 = vmatpush1.msra.mxu0 0.0
        %903 = vmatprep.subr.mxu0 0.0
        %904 = vmatpush1.msra.mxu0 0.0
        %905 = vmatprep.subr.mxu0 0.0
        %906 = vmatpush1.msra.mxu0 0.0
        %907 = vmatprep.subr.mxu0 0.0
        %908 = vmatpush1.msra.mxu0 0.0
        %909 = vmatprep.subr.mxu0 0.0
        %910 = vmatpush1.msra.mxu0 0.0
        %911 = vmatprep.subr.mxu0 0.0
        %912 = vmatpush1.msra.mxu0 0.0
        %913 = vmatprep.subr.mxu0 0.0
        %914 = vmatpush1.msra.mxu0 0.0
        %915 = vmatprep.subr.mxu0 0.0
        %916 = vmatpush1.msra.mxu0 0.0
        %917 = vmatprep.subr.mxu0 0.0
        %918 = vmatpush1.msra.mxu0 0.0
        %919 = vmatprep.subr.mxu0 0.0
        %920 = vmatpush1.msra.mxu0 0.0
        %921 = vmatprep.subr.mxu0 0.0
        %922 = vmatpush1.msra.mxu0 0.0
        %923 = vmatprep.subr.mxu0 0.0
        %924 = vmatpush1.msra.mxu0 0.0
        %925 = vmatprep.subr.mxu0 0.0
        %926 = vmatpush1.msra.mxu0 0.0
        %927 = vmatprep.subr.mxu0 0.0
        %928 = vmatpush1.msra.mxu0 0.0
        %929 = vmatprep.subr.mxu0 0.0
        %930 = vmatpush1.msra.mxu0 0.0
        %931 = vmatprep.subr.mxu0 0.0
        %932 = vmatpush1.msra.mxu0 0.0
        %933 = vmatprep.subr.mxu0 0.0
        %934 = vmatpush1.msra.mxu0 0.0
        %935 = vmatprep.subr.mxu0 0.0
        %936 = vmatpush1.msra.mxu0 0.0
        %937 = vmatprep.subr.mxu0 0.0
        %938 = vmatpush1.msra.mxu0 0.0
        %939 = vmatprep.subr.mxu0 0.0
        %940 = vmatpush1.msra.mxu0 0.0
        %941 = vmatprep.subr.mxu0 0.0
        %942 = vmatpush1.msra.mxu0 0.0
        %943 = vmatprep.mubr.f32.mxu0 0.0
        %944 = vmatmul.mubr.f32.gmra.mrb[0].mxu0 %v451
        %v945 = vpop.f32.mrb[0].mxu0
        %v946 = vadd.f32 0.0, %v945
        %v947 = vpop.f32.mrb[0].mxu0
        %948 = vdwg.mxu0
        %949 = vst [vmem:[%s236 + $0x30] sm:$0xff] %v946
        %950 = vmatprep.subr.mxu0 0.0
        %951 = vmatpush1.msra.mxu0 %v441
        %952 = vmatprep.subr.mxu0 0.0
        %953 = vmatpush1.msra.mxu0 %v446
        %954 = vmatprep.subr.mxu0 0.0
        %955 = vmatpush1.msra.mxu0 0.0
        %956 = vmatprep.subr.mxu0 0.0
        %957 = vmatpush1.msra.mxu0 0.0
        %958 = vmatprep.subr.mxu0 0.0
        %959 = vmatpush1.msra.mxu0 0.0
        %960 = vmatprep.subr.mxu0 0.0
        %961 = vmatpush1.msra.mxu0 0.0
        %962 = vmatprep.subr.mxu0 0.0
        %963 = vmatpush1.msra.mxu0 0.0
        %964 = vmatprep.subr.mxu0 0.0
        %965 = vmatpush1.msra.mxu0 0.0
        %966 = vmatprep.subr.mxu0 0.0
        %967 = vmatpush1.msra.mxu0 0.0
        %968 = vmatprep.subr.mxu0 0.0
        %969 = vmatpush1.msra.mxu0 0.0
        %970 = vmatprep.subr.mxu0 0.0
        %971 = vmatpush1.msra.mxu0 0.0
        %972 = vmatprep.subr.mxu0 0.0
        %973 = vmatpush1.msra.mxu0 0.0
        %974 = vmatprep.subr.mxu0 0.0
        %975 = vmatpush1.msra.mxu0 0.0
        %976 = vmatprep.subr.mxu0 0.0
        %977 = vmatpush1.msra.mxu0 0.0
        %978 = vmatprep.subr.mxu0 0.0
        %979 = vmatpush1.msra.mxu0 0.0
        %980 = vmatprep.subr.mxu0 0.0
        %981 = vmatpush1.msra.mxu0 0.0
        %982 = vmatprep.subr.mxu0 0.0
        %983 = vmatpush1.msra.mxu0 0.0
        %984 = vmatprep.subr.mxu0 0.0
        %985 = vmatpush1.msra.mxu0 0.0
        %986 = vmatprep.subr.mxu0 0.0
        %987 = vmatpush1.msra.mxu0 0.0
        %988 = vmatprep.subr.mxu0 0.0
        %989 = vmatpush1.msra.mxu0 0.0
        %990 = vmatprep.subr.mxu0 0.0
        %991 = vmatpush1.msra.mxu0 0.0
        %992 = vmatprep.subr.mxu0 0.0
        %993 = vmatpush1.msra.mxu0 0.0
        %994 = vmatprep.subr.mxu0 0.0
        %995 = vmatpush1.msra.mxu0 0.0
        %996 = vmatprep.subr.mxu0 0.0
        %997 = vmatpush1.msra.mxu0 0.0
        %998 = vmatprep.subr.mxu0 0.0
        %999 = vmatpush1.msra.mxu0 0.0
        %1000 = vmatprep.subr.mxu0 0.0
        %1001 = vmatpush1.msra.mxu0 0.0
        %1002 = vmatprep.subr.mxu0 0.0
        %1003 = vmatpush1.msra.mxu0 0.0
        %1004 = vmatprep.subr.mxu0 0.0
        %1005 = vmatpush1.msra.mxu0 0.0
        %1006 = vmatprep.subr.mxu0 0.0
        %1007 = vmatpush1.msra.mxu0 0.0
        %1008 = vmatprep.subr.mxu0 0.0
        %1009 = vmatpush1.msra.mxu0 0.0
        %1010 = vmatprep.subr.mxu0 0.0
        %1011 = vmatpush1.msra.mxu0 0.0
        %1012 = vmatprep.subr.mxu0 0.0
        %1013 = vmatpush1.msra.mxu0 0.0
        %1014 = vmatprep.mubr.f32.mxu0 0.0
        %1015 = vmatmul.mubr.f32.gmra.mrb[0].mxu0 %v451
        %v1016 = vpop.f32.mrb[0].mxu0
        %v1017 = vadd.f32 0.0, %v1016
        %v1018 = vpop.f32.mrb[0].mxu0
        %1019 = vdwg.mxu0
        %1020 = vst [vmem:[%s236 + $0x38] sm:$0xff] %v1017
        %s1021 = sand.u32 %s102, 1
        %s1022 = scalar_lea.sflag [#allocation4], %s1021
        %s1023 = sand.u32 %s102, 1
        %s1024 = smul.addr %s1023, 64
        %s1025 = scalar_lea.vmem [#allocation8], %s1024
        // Predicated region
        $region45: #{tpu_custom_call.1} parent=31 // pred_check
          %p1026 = pneg %p112
        $region46: #{tpu_custom_call.1} parent=31 // pred_check_branch
          %1028 = sbr.rel (%p1026) target = $region48
        $region47: #{tpu_custom_call.1} parent=31 // pred_region
          %s1030 = ssub.s32 1024, 1024
          %1031 = vsyncadd %s1022, %s1030
          %s1032 = smul.addr %s21, 128
          %s1033 = scalar_lea.hbm %s3, %s1032
          %s1034 = sshll.u32 %s1025, 4
          %s1035 = int_to_ptr.vmem [resolvable:$true] %s1034
          %1040 = dma.vmem_to_hbm [thread:$0]  %s1035, 1024, %s1033, %s1022, 128, 512, 8
        $region48: #{tpu_custom_call.1} parent=31 // pred_fallthru
          _
      $region32: #{tpu_custom_call.1} parent=5 // pred_fallthru
        _
      %p1041 = scmp.le.s32.totalorder 2, %s16
      // Predicated region
      $region49: #{tpu_custom_call.1} parent=5 // pred_check
        %p1042 = pneg %p1041
      $region50: #{tpu_custom_call.1} parent=5 // pred_check_branch
        %1044 = sbr.rel (%p1042) target = $region52
      $region51: #{tpu_custom_call.1} parent=5 // pred_region
        %s1045 = ssub.s32 %s16, 2
        // Predicated region
        $region53: #{tpu_custom_call.1} parent=51 // pred_check
          %p1046 = pneg %p118
        $region54: #{tpu_custom_call.1} parent=51 // pred_check_branch
          %1048 = sbr.rel (%p1046) target = $region56
        $region55: #{tpu_custom_call.1} parent=51 // pred_region
          %s1049 = sand.u32 %s103, 1
          %s1050 = scalar_lea.sflag [#allocation4], %s1049
          %s1051 = sand.u32 %s103, 1
          %s1052 = smul.addr %s1051, 64
          %s1053 = scalar_lea.vmem [#allocation8], %s1052
          %1054 = dma.done %s1050, 1024
        $region56: #{tpu_custom_call.1} parent=51 // pred_fallthru
          _
      $region52: #{tpu_custom_call.1} parent=5 // pred_fallthru
        _
    $region6: #{tpu_custom_call.1} parent=1 // loop_footer
      %s20 = sadd.s32 1, %s16
    $region7: #{tpu_custom_call.1} parent=1 // loop_footer_branch
      %15 = sbr.rel target = $region3
    $region8: #{tpu_custom_call.1} parent=1 // loop_exit
      _
    %1055 = vsyncpa [#allocation3], 1
    %s1056 = scalar_lea.sflag [#allocation3], 1
    %1057 = vsyncpa %s1056, 1
    %1058 = vsyncpa [#allocation6], 1
    %s1059 = scalar_lea.sflag [#allocation6], 1
    %1060 = vsyncpa %s1059, 1
    %1061 = vsyncpa [#allocation4], 1
    %s1062 = scalar_lea.sflag [#allocation4], 1
    %1063 = vsyncpa %s1062, 1

// kernel: tpu_custom_call.1
$region0: #{tpu_custom_call.1}
  #allocation0 [shape = 'u32[]', space=smem, size = 0x4, offset = 0x4, fixed_abs, tag = 'smem constant byte address 0x4 - core index']
  #allocation1 [shape = 'u32[144,128]{1,0:T(1,128)}', space=vmem, size = 0x12000, scoped, tag = 'internal scratch']
  %s0 = inlined_call_operand.hbm [shape: f32[2,4,16,16], index: 0, kind: input, shape index: {}]
  %s1 = inlined_call_operand.hbm [shape: f32[4,8,16], index: 1, kind: input, shape index: {}]
  %s2 = inlined_call_operand.hbm [shape: f32[16,512], index: 2, kind: input, shape index: {}]
  %s3 = inlined_call_operand.hbm [shape: f32[64,512], index: 3, kind: output, shape index: {}]
  %s4 = sld [smem:[#allocation0]]
  $region57: #{tpu_custom_call.1} parent=0
    _
  %s6 = ssub.s32 1, %s4
  %s7 = scalar_select 0, %s6, %s4
  $region1: #{tpu_custom_call.1} parent=0
    #allocation2 [shape = 'u8[65536]{0}', space=vmem, size = 0x10000, scoped, tag = 'input window, operand 0, single buffered']
    #allocation3 [shape = 's32[2]{0}', space=sflag, size = 0x8, scoped, tag = 'scoped memory for tpu_custom_call.1']
    #allocation4 [shape = 's32[2]{0}', space=sflag, size = 0x8, scoped, tag = 'scoped memory for tpu_custom_call.1']
    #allocation5 [shape = 'u8[8192]{0}', space=vmem, size = 0x2000, scoped, tag = 'input window, operand 1']
    #allocation6 [shape = 's32[2]{0}', space=sflag, size = 0x8, scoped, tag = 'scoped memory for tpu_custom_call.1']
    #allocation7 [shape = 'u8[16384]{0}', space=vmem, size = 0x4000, scoped, tag = 'input window, operand 2']
    #allocation8 [shape = 'u8[65536]{0}', space=vmem, size = 0x10000, scoped, tag = 'output window, operand 0']
    %8 = vsyncpa [#allocation3], 0
    %9 = vsyncpa [#allocation6], 0
    %s10 = scalar_lea.sflag [#allocation6], 1
    %11 = vsyncpa %s10, 0
    %12 = vsyncpa [#allocation4], 0
    %s13 = scalar_lea.sflag [#allocation4], 1
    %14 = vsyncpa %s13, 0
    loop: start=0, step=1, limit=6
    $region2: #{tpu_custom_call.1} parent=1 // loop_pre_header
      _
    $region3: #{tpu_custom_call.1} parent=1 // loop_header
      %s16 = sphi 0, %s20
      %p17 = scmp.ge.s32.totalorder %s16, 6
      %s24 = sphi 0, %s24
      %s26 = sphi 0, %s24
      %s27 = sphi 0, %s26
      %s41 = sphi 0, %s27
      %s47 = sphi 0, %s49
      %s50 = sphi 0, %s47
      %s51 = sphi 0, %s50
      %s67 = sphi 0, %s51
      %s73 = sphi 0, %s75
      %s76 = sphi 0, %s73
      %s77 = sphi 0, %s76
      %s93 = sphi 0, %s77
      %s99 = sphi 0, %s101
      %s102 = sphi 0, %s99
      %s103 = sphi 0, %s102
      %s119 = sphi 0, %s103
    $region4: #{tpu_custom_call.1} parent=1 // loop_header_branch
      %19 = sbr.rel (%p17) target = $region8
    $region5: #{tpu_custom_call.1} parent=1 // loop_body
      %s21 = ssub.s32 %s16, 1
      %s22 = ssub.s32 %s16, 2
      %s23 = sadd.s32 %s16, 1
      %s25 = sadd.s32 %s24, 1
      %p28 = scmp.eq.s32.totalorder %s16, 3
      %p29 = scmp.ne.s32.totalorder %s24, %s26
      %p30 = scmp.eq.s32.totalorder %s16, 0
      %p31 = por %p29, %p30
      %p32 = scmp.ne.s32.totalorder %s24, %s26
      %p33 = scmp.eq.s32.totalorder %s21, 3
      %p34 = por %p32, %p33
      %p35 = scmp.ne.s32.totalorder %s26, %s27
      %p36 = scmp.eq.s32.totalorder %s21, 0
      %p37 = por %p35, %p36
      %p38 = scmp.ne.s32.totalorder %s26, %s27
      %p39 = scmp.eq.s32.totalorder %s22, 3
      %p40 = por %p38, %p39
      %p42 = scmp.ne.s32.totalorder %s27, %s41
      %p43 = scmp.eq.s32.totalorder %s22, 0
      %p44 = por %p42, %p43
      %s45 = ssub.s32 %s16, %s23
      %p46 = scmp.eq.s32.totalorder %s45, 0
      %s48 = sadd.s32 %s47, 1
      %s49 = scalar_select %p46, %s47, %s48
      %p52 = pneg %p46
      %p53 = scmp.eq.s32.totalorder %s16, 3
      %p54 = por %p52, %p53
      %p55 = scmp.ne.s32.totalorder %s47, %s50
      %p56 = scmp.eq.s32.totalorder %s16, 0
      %p57 = por %p55, %p56
      %p58 = scmp.ne.s32.totalorder %s47, %s50
      %p59 = scmp.eq.s32.totalorder %s21, 3
      %p60 = por %p58, %p59
      %p61 = scmp.ne.s32.totalorder %s50, %s51
      %p62 = scmp.eq.s32.totalorder %s21, 0
      %p63 = por %p61, %p62
      %p64 = scmp.ne.s32.totalorder %s50, %s51
      %p65 = scmp.eq.s32.totalorder %s22, 3
      %p66 = por %p64, %p65
      %p68 = scmp.ne.s32.totalorder %s51, %s67
      %p69 = scmp.eq.s32.totalorder %s22, 0
      %p70 = por %p68, %p69
      %s71 = ssub.s32 %s16, %s23
      %p72 = scmp.eq.s32.totalorder %s71, 0
      %s74 = sadd.s32 %s73, 1
      %s75 = scalar_select %p72, %s73, %s74
      %p78 = pneg %p72
      %p79 = scmp.eq.s32.totalorder %s16, 3
      %p80 = por %p78, %p79
      %p81 = scmp.ne.s32.totalorder %s73, %s76
      %p82 = scmp.eq.s32.totalorder %s16, 0
      %p83 = por %p81, %p82
      %p84 = scmp.ne.s32.totalorder %s73, %s76
      %p85 = scmp.eq.s32.totalorder %s21, 3
      %p86 = por %p84, %p85
      %p87 = scmp.ne.s32.totalorder %s76, %s77
      %p88 = scmp.eq.s32.totalorder %s21, 0
      %p89 = por %p87, %p88
      %p90 = scmp.ne.s32.totalorder %s76, %s77
      %p91 = scmp.eq.s32.totalorder %s22, 3
      %p92 = por %p90, %p91
      %p94 = scmp.ne.s32.totalorder %s77, %s93
      %p95 = scmp.eq.s32.totalorder %s22, 0
      %p96 = por %p94, %p95
      %s97 = ssub.s32 %s16, %s23
      %p98 = scmp.eq.s32.totalorder %s97, 0
      %s100 = sadd.s32 %s99, 1
      %s101 = scalar_select %p98, %s99, %s100
      %p104 = pneg %p98
      %p105 = scmp.eq.s32.totalorder %s16, 3
      %p106 = por %p104, %p105
      %p107 = scmp.ne.s32.totalorder %s99, %s102
      %p108 = scmp.eq.s32.totalorder %s16, 0
      %p109 = por %p107, %p108
      %p110 = scmp.ne.s32.totalorder %s99, %s102
      %p111 = scmp.eq.s32.totalorder %s21, 3
      %p112 = por %p110, %p111
      %p113 = scmp.ne.s32.totalorder %s102, %s103
      %p114 = scmp.eq.s32.totalorder %s21, 0
      %p115 = por %p113, %p114
      %p116 = scmp.ne.s32.totalorder %s102, %s103
      %p117 = scmp.eq.s32.totalorder %s22, 3
      %p118 = por %p116, %p117
      %p120 = scmp.ne.s32.totalorder %s103, %s119
      %p121 = scmp.eq.s32.totalorder %s22, 0
      %p122 = por %p120, %p121
      %p123 = scmp.le.s32.totalorder 1, %s16
      %p124 = scmp.lt.s32.totalorder %s16, 5
      %p125 = pnand %p123, %p124
      %p126 = pneg %p125
      // Predicated region
      $region9: #{tpu_custom_call.1} parent=5 // pred_check
        _
      $region10: #{tpu_custom_call.1} parent=5 // pred_check_branch
        %128 = sbr.rel (%p125) target = $region12
      $region11: #{tpu_custom_call.1} parent=5 // pred_region
        %s129 = ssub.s32 %s16, 1
        // Predicated region
        $region13: #{tpu_custom_call.1} parent=11 // pred_check
          %p130 = pneg %p37
        $region14: #{tpu_custom_call.1} parent=11 // pred_check_branch
          %132 = sbr.rel (%p130) target = $region16
        $region15: #{tpu_custom_call.1} parent=11 // pred_region
          %s134 = ssub.s32 2048, 2048
          %135 = vsyncadd [#allocation3], %s134
          %s136 = sshll.u32 [#allocation2], 4
          %s137 = int_to_ptr.vmem [resolvable:$true] %s136
          %142 = dma.hbm_to_vmem [thread:$0]  %s0, 2048, %s137, [#allocation3], 128, 128, 8
        $region16: #{tpu_custom_call.1} parent=11 // pred_fallthru
          _
      $region12: #{tpu_custom_call.1} parent=5 // pred_fallthru
        _
      %p143 = scmp.lt.s32.totalorder %s16, 4
      // Predicated region
      $region17: #{tpu_custom_call.1} parent=5 // pred_check
        %p144 = pneg %p143
      $region18: #{tpu_custom_call.1} parent=5 // pred_check_branch
        %146 = sbr.rel (%p144) target = $region20
      $region19: #{tpu_custom_call.1} parent=5 // pred_region
        // Predicated region
        $region21: #{tpu_custom_call.1} parent=19 // pred_check
          %p147 = pneg %p57
        $region22: #{tpu_custom_call.1} parent=19 // pred_check_branch
          %149 = sbr.rel (%p147) target = $region24
        $region23: #{tpu_custom_call.1} parent=19 // pred_region
          %s150 = sand.u32 %s16, 1
          %s151 = scalar_lea.sflag [#allocation6], %s150
          %s152 = sand.u32 %s47, 1
          %s153 = smul.addr %s152, 8
          %s154 = scalar_lea.vmem [#allocation5], %s153
          %s156 = ssub.s32 128, 128
          %157 = vsyncadd %s151, %s156
          %s158 = smul.addr %s16, 128
          %s159 = scalar_lea.hbm %s1, %s158
          %s161 = sshll.u32 %s154, 4
          %s162 = int_to_ptr.vmem [resolvable:$true] %s161
          %164 = dma.hbm_to_vmem [thread:$0]  %s159, 128, %s162, %s151
        $region24: #{tpu_custom_call.1} parent=19 // pred_fallthru
          _
        // Predicated region
        $region25: #{tpu_custom_call.1} parent=19 // pred_check
          %p165 = pneg %p83
        $region26: #{tpu_custom_call.1} parent=19 // pred_check_branch
          %167 = sbr.rel (%p165) target = $region28
        $region27: #{tpu_custom_call.1} parent=19 // pred_region
          %s168 = sand.u32 %s16, 1
          %s169 = scalar_lea.sflag [#allocation6], %s168
          %s170 = sand.u32 %s73, 1
          %s171 = smul.addr %s170, 16
          %s172 = scalar_lea.vmem [#allocation7], %s171
          %s174 = ssub.s32 256, 256
          %175 = vsyncadd %s169, %s174
          %s176 = smul.addr %s16, 128
          %s177 = scalar_lea.hbm %s2, %s176
          %s178 = sshll.u32 %s172, 4
          %s179 = int_to_ptr.vmem [resolvable:$true] %s178
          %184 = dma.hbm_to_vmem [thread:$0]  %s177, 256, %s179, %s169, 512, 128, 8
        $region28: #{tpu_custom_call.1} parent=19 // pred_fallthru
          _
      $region20: #{tpu_custom_call.1} parent=5 // pred_fallthru
        _
      %p185 = scmp.le.s32.totalorder 1, %s16
      %p186 = scmp.lt.s32.totalorder %s16, 5
      %p187 = pnand %p185, %p186
      %p188 = pneg %p187
      // Predicated region
      $region29: #{tpu_custom_call.1} parent=5 // pred_check
        _
      $region30: #{tpu_custom_call.1} parent=5 // pred_check_branch
        %190 = sbr.rel (%p187) target = $region32
      $region31: #{tpu_custom_call.1} parent=5 // pred_region
        %s191 = ssub.s32 %s16, 1
        // Predicated region
        $region33: #{tpu_custom_call.1} parent=31 // pred_check
          %p192 = pneg %p37
        $region34: #{tpu_custom_call.1} parent=31 // pred_check_branch
          %194 = sbr.rel (%p192) target = $region36
        $region35: #{tpu_custom_call.1} parent=31 // pred_region
          %195 = dma.done [#allocation3], 2048
        $region36: #{tpu_custom_call.1} parent=31 // pred_fallthru
          _
        %s196 = sand.u32 %s21, 1
        %s197 = scalar_lea.sflag [#allocation6], %s196
        %s198 = sand.u32 %s50, 1
        %s199 = smul.addr %s198, 8
        %s200 = scalar_lea.vmem [#allocation5], %s199
        // Predicated region
        $region37: #{tpu_custom_call.1} parent=31 // pred_check
          %p201 = pneg %p63
        $region38: #{tpu_custom_call.1} parent=31 // pred_check_branch
          %203 = sbr.rel (%p201) target = $region40
        $region39: #{tpu_custom_call.1} parent=31 // pred_region
          %204 = dma.done %s197, 128
        $region40: #{tpu_custom_call.1} parent=31 // pred_fallthru
          _
        %s205 = sand.u32 %s21, 1
        %s206 = scalar_lea.sflag [#allocation6], %s205
        %s207 = sand.u32 %s76, 1
        %s208 = smul.addr %s207, 16
        %s209 = scalar_lea.vmem [#allocation7], %s208
        // Predicated region
        $region41: #{tpu_custom_call.1} parent=31 // pred_check
          %p210 = pneg %p89
        $region42: #{tpu_custom_call.1} parent=31 // pred_check_branch
          %212 = sbr.rel (%p210) target = $region44
        $region43: #{tpu_custom_call.1} parent=31 // pred_region
          %213 = dma.done %s206, 256
        $region44: #{tpu_custom_call.1} parent=31 // pred_fallthru
          _
        %p214 = pneg %p37
        %p215 = pneg %p34
        %s216 = sand.u32 %s21, 1
        %s217 = scalar_lea.sflag [#allocation6], %s216
        %s218 = sand.u32 %s50, 1
        %s219 = smul.addr %s218, 8
        %s220 = scalar_lea.vmem [#allocation5], %s219
        %p221 = pneg %p63
        %p222 = pneg %p60
        %s223 = sand.u32 %s21, 1
        %s224 = scalar_lea.sflag [#allocation6], %s223
        %s225 = sand.u32 %s76, 1
        %s226 = smul.addr %s225, 16
        %s227 = scalar_lea.vmem [#allocation7], %s226
        %p228 = pneg %p89
        %p229 = pneg %p86
        %p230 = pneg %p115
        %p231 = pneg %p112
        %s232 = sand.u32 %s102, 1
        %s233 = scalar_lea.sflag [#allocation4], %s232
        %s234 = sand.u32 %s102, 1
        %s235 = smul.addr %s234, 64
        %s236 = scalar_lea.vmem [#allocation8], %s235
        %v237 = vld [vmem:[#allocation2] sm:$0xff]
        %v238 = vld [vmem:[#allocation2 + $0x8] sm:$0xff]
        %v239 = vld [vmem:[#allocation2 + $0x10] sm:$0xff]
        %v240 = vld [vmem:[#allocation2 + $0x18] sm:$0xff]
        %v241 = vld [vmem:[#allocation2 + $0x20] sm:$0xff]
        %v242 = vld [vmem:[#allocation2 + $0x28] sm:$0xff]
        %v243 = vld [vmem:[#allocation2 + $0x30] sm:$0xff]
        %v244 = vld [vmem:[#allocation2 + $0x38] sm:$0xff]
        %v245 = vld [vmem:[#allocation2 + $0x40] sm:$0xff]
        %v246 = vld [vmem:[#allocation2 + $0x48] sm:$0xff]
        %v247 = vld [vmem:[#allocation2 + $0x50] sm:$0xff]
        %v248 = vld [vmem:[#allocation2 + $0x58] sm:$0xff]
        %v249 = vld [vmem:[#allocation2 + $0x60] sm:$0xff]
        %v250 = vld [vmem:[#allocation2 + $0x68] sm:$0xff]
        %v251 = vld [vmem:[#allocation2 + $0x70] sm:$0xff]
        %v252 = vld [vmem:[#allocation2 + $0x78] sm:$0xff]
        %v253 = vld [vmem:[%s209] sm:$0xff]
        %v254 = vld [vmem:[%s209 + $0x8] sm:$0xff]
        %vm255 = vcmask 130048
        %v257 = vsel %vm255, %v237, 0
        %v260 = vsel %vm255, %v238, 0
        %v263 = vsel %vm255, %v239, 0
        %v266 = vsel %vm255, %v240, 0
        %v269 = vsel %vm255, %v241, 0
        %v272 = vsel %vm255, %v242, 0
        %v275 = vsel %vm255, %v243, 0
        %v278 = vsel %vm255, %v244, 0
        %v281 = vsel %vm255, %v245, 0
        %v284 = vsel %vm255, %v246, 0
        %v287 = vsel %vm255, %v247, 0
        %v290 = vsel %vm255, %v248, 0
        %v293 = vsel %vm255, %v249, 0
        %v296 = vsel %vm255, %v250, 0
        %v299 = vsel %vm255, %v251, 0
        %v302 = vsel %vm255, %v252, 0
        %304 = vmatprep.subr.mxu0 0.0
        %305 = vmatpush1.msra.mxu0 %v253
        %306 = vmatprep.subr.mxu0 0.0
        %307 = vmatpush1.msra.mxu0 %v254
        %308 = vmatprep.subr.mxu0 0.0
        %309 = vmatpush1.msra.mxu0 0.0
        %310 = vmatprep.subr.mxu0 0.0
        %311 = vmatpush1.msra.mxu0 0.0
        %312 = vmatprep.subr.mxu0 0.0
        %313 = vmatpush1.msra.mxu0 0.0
        %314 = vmatprep.subr.mxu0 0.0
        %315 = vmatpush1.msra.mxu0 0.0
        %316 = vmatprep.subr.mxu0 0.0
        %317 = vmatpush1.msra.mxu0 0.0
        %318 = vmatprep.subr.mxu0 0.0
        %319 = vmatpush1.msra.mxu0 0.0
        %320 = vmatprep.subr.mxu0 0.0
        %321 = vmatpush1.msra.mxu0 0.0
        %322 = vmatprep.subr.mxu0 0.0
        %323 = vmatpush1.msra.mxu0 0.0
        %324 = vmatprep.subr.mxu0 0.0
        %325 = vmatpush1.msra.mxu0 0.0
        %326 = vmatprep.subr.mxu0 0.0
        %327 = vmatpush1.msra.mxu0 0.0
        %328 = vmatprep.subr.mxu0 0.0
        %329 = vmatpush1.msra.mxu0 0.0
        %330 = vmatprep.subr.mxu0 0.0
        %331 = vmatpush1.msra.mxu0 0.0
        %332 = vmatprep.subr.mxu0 0.0
        %333 = vmatpush1.msra.mxu0 0.0
        %334 = vmatprep.subr.mxu0 0.0
        %335 = vmatpush1.msra.mxu0 0.0
        %336 = vmatprep.subr.mxu0 0.0
        %337 = vmatpush1.msra.mxu0 0.0
        %338 = vmatprep.subr.mxu0 0.0
        %339 = vmatpush1.msra.mxu0 0.0
        %340 = vmatprep.subr.mxu0 0.0
        %341 = vmatpush1.msra.mxu0 0.0
        %342 = vmatprep.subr.mxu0 0.0
        %343 = vmatpush1.msra.mxu0 0.0
        %344 = vmatprep.subr.mxu0 0.0
        %345 = vmatpush1.msra.mxu0 0.0
        %346 = vmatprep.subr.mxu0 0.0
        %347 = vmatpush1.msra.mxu0 0.0
        %348 = vmatprep.subr.mxu0 0.0
        %349 = vmatpush1.msra.mxu0 0.0
        %350 = vmatprep.subr.mxu0 0.0
        %351 = vmatpush1.msra.mxu0 0.0
        %352 = vmatprep.subr.mxu0 0.0
        %353 = vmatpush1.msra.mxu0 0.0
        %354 = vmatprep.subr.mxu0 0.0
        %355 = vmatpush1.msra.mxu0 0.0
        %356 = vmatprep.subr.mxu0 0.0
        %357 = vmatpush1.msra.mxu0 0.0
        %358 = vmatprep.subr.mxu0 0.0
        %359 = vmatpush1.msra.mxu0 0.0
        %360 = vmatprep.subr.mxu0 0.0
        %361 = vmatpush1.msra.mxu0 0.0
        %362 = vmatprep.subr.mxu0 0.0
        %363 = vmatpush1.msra.mxu0 0.0
        %364 = vmatprep.subr.mxu0 0.0
        %365 = vmatpush1.msra.mxu0 0.0
        %366 = vmatprep.subr.mxu0 0.0
        %367 = vmatpush1.msra.mxu0 0.0
        %368 = vmatprep.mubr.f32.mxu0 0.0
        %369 = vmatmul.mubr.f32.gmra.mrb[0].mxu0 %v257
        %v370 = vpop.f32.mrb[0].mxu0
        %v371 = vadd.f32 0.0, %v370
        %v372 = vpop.f32.mrb[0].mxu0
        %373 = vmatprep.mubr.f32.mxu0 0.0
        %374 = vmatmul.mubr.f32.gmra.mrb[0].mxu0 %v260
        %v375 = vpop.f32.mrb[0].mxu0
        %v376 = vadd.f32 0.0, %v375
        %v377 = vpop.f32.mrb[0].mxu0
        %378 = vmatprep.mubr.f32.mxu0 0.0
        %379 = vmatmul.mubr.f32.gmra.mrb[0].mxu0 %v263
        %v380 = vpop.f32.mrb[0].mxu0
        %v381 = vadd.f32 0.0, %v380
        %v382 = vpop.f32.mrb[0].mxu0
        %383 = vmatprep.mubr.f32.mxu0 0.0
        %384 = vmatmul.mubr.f32.gmra.mrb[0].mxu0 %v266
        %v385 = vpop.f32.mrb[0].mxu0
        %v386 = vadd.f32 0.0, %v385
        %v387 = vpop.f32.mrb[0].mxu0
        %388 = vmatprep.mubr.f32.mxu0 0.0
        %389 = vmatmul.mubr.f32.gmra.mrb[0].mxu0 %v269
        %v390 = vpop.f32.mrb[0].mxu0
        %v391 = vadd.f32 0.0, %v390
        %v392 = vpop.f32.mrb[0].mxu0
        %393 = vmatprep.mubr.f32.mxu0 0.0
        %394 = vmatmul.mubr.f32.gmra.mrb[0].mxu0 %v272
        %v395 = vpop.f32.mrb[0].mxu0
        %v396 = vadd.f32 0.0, %v395
        %v397 = vpop.f32.mrb[0].mxu0
        %398 = vmatprep.mubr.f32.mxu0 0.0
        %399 = vmatmul.mubr.f32.gmra.mrb[0].mxu0 %v275
        %v400 = vpop.f32.mrb[0].mxu0
        %v401 = vadd.f32 0.0, %v400
        %v402 = vpop.f32.mrb[0].mxu0
        %403 = vmatprep.mubr.f32.mxu0 0.0
        %404 = vmatmul.mubr.f32.gmra.mrb[0].mxu0 %v278
        %v405 = vpop.f32.mrb[0].mxu0
        %v406 = vadd.f32 0.0, %v405
        %v407 = vpop.f32.mrb[0].mxu0
        %408 = vmatprep.mubr.f32.mxu0 0.0
        %409 = vmatmul.mubr.f32.gmra.mrb[0].mxu0 %v281
        %v410 = vpop.f32.mrb[0].mxu0
        %v411 = vadd.f32 0.0, %v410
        %v412 = vpop.f32.mrb[0].mxu0
        %413 = vmatprep.mubr.f32.mxu0 0.0
        %414 = vmatmul.mubr.f32.gmra.mrb[0].mxu0 %v284
        %v415 = vpop.f32.mrb[0].mxu0
        %v416 = vadd.f32 0.0, %v415
        %v417 = vpop.f32.mrb[0].mxu0
        %418 = vmatprep.mubr.f32.mxu0 0.0
        %419 = vmatmul.mubr.f32.gmra.mrb[0].mxu0 %v287
        %v420 = vpop.f32.mrb[0].mxu0
        %v421 = vadd.f32 0.0, %v420
        %v422 = vpop.f32.mrb[0].mxu0
        %423 = vmatprep.mubr.f32.mxu0 0.0
        %424 = vmatmul.mubr.f32.gmra.mrb[0].mxu0 %v290
        %v425 = vpop.f32.mrb[0].mxu0
        %v426 = vadd.f32 0.0, %v425
        %v427 = vpop.f32.mrb[0].mxu0
        %428 = vmatprep.mubr.f32.mxu0 0.0
        %429 = vmatmul.mubr.f32.gmra.mrb[0].mxu0 %v293
        %v430 = vpop.f32.mrb[0].mxu0
        %v431 = vadd.f32 0.0, %v430
        %v432 = vpop.f32.mrb[0].mxu0
        %433 = vmatprep.mubr.f32.mxu0 0.0
        %434 = vmatmul.mubr.f32.gmra.mrb[0].mxu0 %v296
        %v435 = vpop.f32.mrb[0].mxu0
        %v436 = vadd.f32 0.0, %v435
        %v437 = vpop.f32.mrb[0].mxu0
        %438 = vmatprep.mubr.f32.mxu0 0.0
        %439 = vmatmul.mubr.f32.gmra.mrb[0].mxu0 %v299
        %v440 = vpop.f32.mrb[0].mxu0
        %v441 = vadd.f32 0.0, %v440
        %v442 = vpop.f32.mrb[0].mxu0
        %443 = vmatprep.mubr.f32.mxu0 0.0
        %444 = vmatmul.mubr.f32.gmra.mrb[0].mxu0 %v302
        %v445 = vpop.f32.mrb[0].mxu0
        %v446 = vadd.f32 0.0, %v445
        %v447 = vpop.f32.mrb[0].mxu0
        %448 = vdwg.mxu0
        %v449 = vld [vmem:[%s200] sm:$0xff]
        %v451 = vsel %vm255, %v449, 0
        %453 = vmatprep.subr.mxu0 0.0
        %454 = vmatpush1.msra.mxu0 %v371
        %455 = vmatprep.subr.mxu0 0.0
        %456 = vmatpush1.msra.mxu0 %v376
        %457 = vmatprep.subr.mxu0 0.0
        %458 = vmatpush1.msra.mxu0 0.0
        %459 = vmatprep.subr.mxu0 0.0
        %460 = vmatpush1.msra.mxu0 0.0
        %461 = vmatprep.subr.mxu0 0.0
        %462 = vmatpush1.msra.mxu0 0.0
        %463 = vmatprep.subr.mxu0 0.0
        %464 = vmatpush1.msra.mxu0 0.0
        %465 = vmatprep.subr.mxu0 0.0
        %466 = vmatpush1.msra.mxu0 0.0
        %467 = vmatprep.subr.mxu0 0.0
        %468 = vmatpush1.msra.mxu0 0.0
        %469 = vmatprep.subr.mxu0 0.0
        %470 = vmatpush1.msra.mxu0 0.0
        %471 = vmatprep.subr.mxu0 0.0
        %472 = vmatpush1.msra.mxu0 0.0
        %473 = vmatprep.subr.mxu0 0.0
        %474 = vmatpush1.msra.mxu0 0.0
        %475 = vmatprep.subr.mxu0 0.0
        %476 = vmatpush1.msra.mxu0 0.0
        %477 = vmatprep.subr.mxu0 0.0
        %478 = vmatpush1.msra.mxu0 0.0
        %479 = vmatprep.subr.mxu0 0.0
        %480 = vmatpush1.msra.mxu0 0.0
        %481 = vmatprep.subr.mxu0 0.0
        %482 = vmatpush1.msra.mxu0 0.0
        %483 = vmatprep.subr.mxu0 0.0
        %484 = vmatpush1.msra.mxu0 0.0
        %485 = vmatprep.subr.mxu0 0.0
        %486 = vmatpush1.msra.mxu0 0.0
        %487 = vmatprep.subr.mxu0 0.0
        %488 = vmatpush1.msra.mxu0 0.0
        %489 = vmatprep.subr.mxu0 0.0
        %490 = vmatpush1.msra.mxu0 0.0
        %491 = vmatprep.subr.mxu0 0.0
        %492 = vmatpush1.msra.mxu0 0.0
        %493 = vmatprep.subr.mxu0 0.0
        %494 = vmatpush1.msra.mxu0 0.0
        %495 = vmatprep.subr.mxu0 0.0
        %496 = vmatpush1.msra.mxu0 0.0
        %497 = vmatprep.subr.mxu0 0.0
        %498 = vmatpush1.msra.mxu0 0.0
        %499 = vmatprep.subr.mxu0 0.0
        %500 = vmatpush1.msra.mxu0 0.0
        %501 = vmatprep.subr.mxu0 0.0
        %502 = vmatpush1.msra.mxu0 0.0
        %503 = vmatprep.subr.mxu0 0.0
        %504 = vmatpush1.msra.mxu0 0.0
        %505 = vmatprep.subr.mxu0 0.0
        %506 = vmatpush1.msra.mxu0 0.0
        %507 = vmatprep.subr.mxu0 0.0
        %508 = vmatpush1.msra.mxu0 0.0
        %509 = vmatprep.subr.mxu0 0.0
        %510 = vmatpush1.msra.mxu0 0.0
        %511 = vmatprep.subr.mxu0 0.0
        %512 = vmatpush1.msra.mxu0 0.0
        %513 = vmatprep.subr.mxu0 0.0
        %514 = vmatpush1.msra.mxu0 0.0
        %515 = vmatprep.subr.mxu0 0.0
        %516 = vmatpush1.msra.mxu0 0.0
        %517 = vmatprep.mubr.f32.mxu0 0.0
        %518 = vmatmul.mubr.f32.gmra.mrb[0].mxu0 %v451
        %v519 = vpop.f32.mrb[0].mxu0
        %v520 = vadd.f32 0.0, %v519
        %v521 = vpop.f32.mrb[0].mxu0
        %522 = vdwg.mxu0
        %523 = vst [vmem:[%s236] sm:$0xff] %v520
        %524 = vmatprep.subr.mxu0 0.0
        %525 = vmatpush1.msra.mxu0 %v381
        %526 = vmatprep.subr.mxu0 0.0
        %527 = vmatpush1.msra.mxu0 %v386
        %528 = vmatprep.subr.mxu0 0.0
        %529 = vmatpush1.msra.mxu0 0.0
        %530 = vmatprep.subr.mxu0 0.0
        %531 = vmatpush1.msra.mxu0 0.0
        %532 = vmatprep.subr.mxu0 0.0
        %533 = vmatpush1.msra.mxu0 0.0
        %534 = vmatprep.subr.mxu0 0.0
        %535 = vmatpush1.msra.mxu0 0.0
        %536 = vmatprep.subr.mxu0 0.0
        %537 = vmatpush1.msra.mxu0 0.0
        %538 = vmatprep.subr.mxu0 0.0
        %539 = vmatpush1.msra.mxu0 0.0
        %540 = vmatprep.subr.mxu0 0.0
        %541 = vmatpush1.msra.mxu0 0.0
        %542 = vmatprep.subr.mxu0 0.0
        %543 = vmatpush1.msra.mxu0 0.0
        %544 = vmatprep.subr.mxu0 0.0
        %545 = vmatpush1.msra.mxu0 0.0
        %546 = vmatprep.subr.mxu0 0.0
        %547 = vmatpush1.msra.mxu0 0.0
        %548 = vmatprep.subr.mxu0 0.0
        %549 = vmatpush1.msra.mxu0 0.0
        %550 = vmatprep.subr.mxu0 0.0
        %551 = vmatpush1.msra.mxu0 0.0
        %552 = vmatprep.subr.mxu0 0.0
        %553 = vmatpush1.msra.mxu0 0.0
        %554 = vmatprep.subr.mxu0 0.0
        %555 = vmatpush1.msra.mxu0 0.0
        %556 = vmatprep.subr.mxu0 0.0
        %557 = vmatpush1.msra.mxu0 0.0
        %558 = vmatprep.subr.mxu0 0.0
        %559 = vmatpush1.msra.mxu0 0.0
        %560 = vmatprep.subr.mxu0 0.0
        %561 = vmatpush1.msra.mxu0 0.0
        %562 = vmatprep.subr.mxu0 0.0
        %563 = vmatpush1.msra.mxu0 0.0
        %564 = vmatprep.subr.mxu0 0.0
        %565 = vmatpush1.msra.mxu0 0.0
        %566 = vmatprep.subr.mxu0 0.0
        %567 = vmatpush1.msra.mxu0 0.0
        %568 = vmatprep.subr.mxu0 0.0
        %569 = vmatpush1.msra.mxu0 0.0
        %570 = vmatprep.subr.mxu0 0.0
        %571 = vmatpush1.msra.mxu0 0.0
        %572 = vmatprep.subr.mxu0 0.0
        %573 = vmatpush1.msra.mxu0 0.0
        %574 = vmatprep.subr.mxu0 0.0
        %575 = vmatpush1.msra.mxu0 0.0
        %576 = vmatprep.subr.mxu0 0.0
        %577 = vmatpush1.msra.mxu0 0.0
        %578 = vmatprep.subr.mxu0 0.0
        %579 = vmatpush1.msra.mxu0 0.0
        %580 = vmatprep.subr.mxu0 0.0
        %581 = vmatpush1.msra.mxu0 0.0
        %582 = vmatprep.subr.mxu0 0.0
        %583 = vmatpush1.msra.mxu0 0.0
        %584 = vmatprep.subr.mxu0 0.0
        %585 = vmatpush1.msra.mxu0 0.0
        %586 = vmatprep.subr.mxu0 0.0
        %587 = vmatpush1.msra.mxu0 0.0
        %588 = vmatprep.mubr.f32.mxu0 0.0
        %589 = vmatmul.mubr.f32.gmra.mrb[0].mxu0 %v451
        %v590 = vpop.f32.mrb[0].mxu0
        %v591 = vadd.f32 0.0, %v590
        %v592 = vpop.f32.mrb[0].mxu0
        %593 = vdwg.mxu0
        %594 = vst [vmem:[%s236 + $0x8] sm:$0xff] %v591
        %595 = vmatprep.subr.mxu0 0.0
        %596 = vmatpush1.msra.mxu0 %v391
        %597 = vmatprep.subr.mxu0 0.0
        %598 = vmatpush1.msra.mxu0 %v396
        %599 = vmatprep.subr.mxu0 0.0
        %600 = vmatpush1.msra.mxu0 0.0
        %601 = vmatprep.subr.mxu0 0.0
        %602 = vmatpush1.msra.mxu0 0.0
        %603 = vmatprep.subr.mxu0 0.0
        %604 = vmatpush1.msra.mxu0 0.0
        %605 = vmatprep.subr.mxu0 0.0
        %606 = vmatpush1.msra.mxu0 0.0
        %607 = vmatprep.subr.mxu0 0.0
        %608 = vmatpush1.msra.mxu0 0.0
        %609 = vmatprep.subr.mxu0 0.0
        %610 = vmatpush1.msra.mxu0 0.0
        %611 = vmatprep.subr.mxu0 0.0
        %612 = vmatpush1.msra.mxu0 0.0
        %613 = vmatprep.subr.mxu0 0.0
        %614 = vmatpush1.msra.mxu0 0.0
        %615 = vmatprep.subr.mxu0 0.0
        %616 = vmatpush1.msra.mxu0 0.0
        %617 = vmatprep.subr.mxu0 0.0
        %618 = vmatpush1.msra.mxu0 0.0
        %619 = vmatprep.subr.mxu0 0.0
        %620 = vmatpush1.msra.mxu0 0.0
        %621 = vmatprep.subr.mxu0 0.0
        %622 = vmatpush1.msra.mxu0 0.0
        %623 = vmatprep.subr.mxu0 0.0
        %624 = vmatpush1.msra.mxu0 0.0
        %625 = vmatprep.subr.mxu0 0.0
        %626 = vmatpush1.msra.mxu0 0.0
        %627 = vmatprep.subr.mxu0 0.0
        %628 = vmatpush1.msra.mxu0 0.0
        %629 = vmatprep.subr.mxu0 0.0
        %630 = vmatpush1.msra.mxu0 0.0
        %631 = vmatprep.subr.mxu0 0.0
        %632 = vmatpush1.msra.mxu0 0.0
        %633 = vmatprep.subr.mxu0 0.0
        %634 = vmatpush1.msra.mxu0 0.0
        %635 = vmatprep.subr.mxu0 0.0
        %636 = vmatpush1.msra.mxu0 0.0
        %637 = vmatprep.subr.mxu0 0.0
        %638 = vmatpush1.msra.mxu0 0.0
        %639 = vmatprep.subr.mxu0 0.0
        %640 = vmatpush1.msra.mxu0 0.0
        %641 = vmatprep.subr.mxu0 0.0
        %642 = vmatpush1.msra.mxu0 0.0
        %643 = vmatprep.subr.mxu0 0.0
        %644 = vmatpush1.msra.mxu0 0.0
        %645 = vmatprep.subr.mxu0 0.0
        %646 = vmatpush1.msra.mxu0 0.0
        %647 = vmatprep.subr.mxu0 0.0
        %648 = vmatpush1.msra.mxu0 0.0
        %649 = vmatprep.subr.mxu0 0.0
        %650 = vmatpush1.msra.mxu0 0.0
        %651 = vmatprep.subr.mxu0 0.0
        %652 = vmatpush1.msra.mxu0 0.0
        %653 = vmatprep.subr.mxu0 0.0
        %654 = vmatpush1.msra.mxu0 0.0
        %655 = vmatprep.subr.mxu0 0.0
        %656 = vmatpush1.msra.mxu0 0.0
        %657 = vmatprep.subr.mxu0 0.0
        %658 = vmatpush1.msra.mxu0 0.0
        %659 = vmatprep.mubr.f32.mxu0 0.0
        %660 = vmatmul.mubr.f32.gmra.mrb[0].mxu0 %v451
        %v661 = vpop.f32.mrb[0].mxu0
        %v662 = vadd.f32 0.0, %v661
        %v663 = vpop.f32.mrb[0].mxu0
        %664 = vdwg.mxu0
        %665 = vst [vmem:[%s236 + $0x10] sm:$0xff] %v662
        %666 = vmatprep.subr.mxu0 0.0
        %667 = vmatpush1.msra.mxu0 %v401
        %668 = vmatprep.subr.mxu0 0.0
        %669 = vmatpush1.msra.mxu0 %v406
        %670 = vmatprep.subr.mxu0 0.0
        %671 = vmatpush1.msra.mxu0 0.0
        %672 = vmatprep.subr.mxu0 0.0
        %673 = vmatpush1.msra.mxu0 0.0
        %674 = vmatprep.subr.mxu0 0.0
        %675 = vmatpush1.msra.mxu0 0.0
        %676 = vmatprep.subr.mxu0 0.0
        %677 = vmatpush1.msra.mxu0 0.0
        %678 = vmatprep.subr.mxu0 0.0
        %679 = vmatpush1.msra.mxu0 0.0
        %680 = vmatprep.subr.mxu0 0.0
        %681 = vmatpush1.msra.mxu0 0.0
        %682 = vmatprep.subr.mxu0 0.0
        %683 = vmatpush1.msra.mxu0 0.0
        %684 = vmatprep.subr.mxu0 0.0
        %685 = vmatpush1.msra.mxu0 0.0
        %686 = vmatprep.subr.mxu0 0.0
        %687 = vmatpush1.msra.mxu0 0.0
        %688 = vmatprep.subr.mxu0 0.0
        %689 = vmatpush1.msra.mxu0 0.0
        %690 = vmatprep.subr.mxu0 0.0
        %691 = vmatpush1.msra.mxu0 0.0
        %692 = vmatprep.subr.mxu0 0.0
        %693 = vmatpush1.msra.mxu0 0.0
        %694 = vmatprep.subr.mxu0 0.0
        %695 = vmatpush1.msra.mxu0 0.0
        %696 = vmatprep.subr.mxu0 0.0
        %697 = vmatpush1.msra.mxu0 0.0
        %698 = vmatprep.subr.mxu0 0.0
        %699 = vmatpush1.msra.mxu0 0.0
        %700 = vmatprep.subr.mxu0 0.0
        %701 = vmatpush1.msra.mxu0 0.0
        %702 = vmatprep.subr.mxu0 0.0
        %703 = vmatpush1.msra.mxu0 0.0
        %704 = vmatprep.subr.mxu0 0.0
        %705 = vmatpush1.msra.mxu0 0.0
        %706 = vmatprep.subr.mxu0 0.0
        %707 = vmatpush1.msra.mxu0 0.0
        %708 = vmatprep.subr.mxu0 0.0
        %709 = vmatpush1.msra.mxu0 0.0
        %710 = vmatprep.subr.mxu0 0.0
        %711 = vmatpush1.msra.mxu0 0.0
        %712 = vmatprep.subr.mxu0 0.0
        %713 = vmatpush1.msra.mxu0 0.0
        %714 = vmatprep.subr.mxu0 0.0
        %715 = vmatpush1.msra.mxu0 0.0
        %716 = vmatprep.subr.mxu0 0.0
        %717 = vmatpush1.msra.mxu0 0.0
        %718 = vmatprep.subr.mxu0 0.0
        %719 = vmatpush1.msra.mxu0 0.0
        %720 = vmatprep.subr.mxu0 0.0
        %721 = vmatpush1.msra.mxu0 0.0
        %722 = vmatprep.subr.mxu0 0.0
        %723 = vmatpush1.msra.mxu0 0.0
        %724 = vmatprep.subr.mxu0 0.0
        %725 = vmatpush1.msra.mxu0 0.0
        %726 = vmatprep.subr.mxu0 0.0
        %727 = vmatpush1.msra.mxu0 0.0
        %728 = vmatprep.subr.mxu0 0.0
        %729 = vmatpush1.msra.mxu0 0.0
        %730 = vmatprep.mubr.f32.mxu0 0.0
        %731 = vmatmul.mubr.f32.gmra.mrb[0].mxu0 %v451
        %v732 = vpop.f32.mrb[0].mxu0
        %v733 = vadd.f32 0.0, %v732
        %v734 = vpop.f32.mrb[0].mxu0
        %735 = vdwg.mxu0
        %736 = vst [vmem:[%s236 + $0x18] sm:$0xff] %v733
        %737 = vmatprep.subr.mxu0 0.0
        %738 = vmatpush1.msra.mxu0 %v411
        %739 = vmatprep.subr.mxu0 0.0
        %740 = vmatpush1.msra.mxu0 %v416
        %741 = vmatprep.subr.mxu0 0.0
        %742 = vmatpush1.msra.mxu0 0.0
        %743 = vmatprep.subr.mxu0 0.0
        %744 = vmatpush1.msra.mxu0 0.0
        %745 = vmatprep.subr.mxu0 0.0
        %746 = vmatpush1.msra.mxu0 0.0
        %747 = vmatprep.subr.mxu0 0.0
        %748 = vmatpush1.msra.mxu0 0.0
        %749 = vmatprep.subr.mxu0 0.0
        %750 = vmatpush1.msra.mxu0 0.0
        %751 = vmatprep.subr.mxu0 0.0
        %752 = vmatpush1.msra.mxu0 0.0
        %753 = vmatprep.subr.mxu0 0.0
        %754 = vmatpush1.msra.mxu0 0.0
        %755 = vmatprep.subr.mxu0 0.0
        %756 = vmatpush1.msra.mxu0 0.0
        %757 = vmatprep.subr.mxu0 0.0
        %758 = vmatpush1.msra.mxu0 0.0
        %759 = vmatprep.subr.mxu0 0.0
        %760 = vmatpush1.msra.mxu0 0.0
        %761 = vmatprep.subr.mxu0 0.0
        %762 = vmatpush1.msra.mxu0 0.0
        %763 = vmatprep.subr.mxu0 0.0
        %764 = vmatpush1.msra.mxu0 0.0
        %765 = vmatprep.subr.mxu0 0.0
        %766 = vmatpush1.msra.mxu0 0.0
        %767 = vmatprep.subr.mxu0 0.0
        %768 = vmatpush1.msra.mxu0 0.0
        %769 = vmatprep.subr.mxu0 0.0
        %770 = vmatpush1.msra.mxu0 0.0
        %771 = vmatprep.subr.mxu0 0.0
        %772 = vmatpush1.msra.mxu0 0.0
        %773 = vmatprep.subr.mxu0 0.0
        %774 = vmatpush1.msra.mxu0 0.0
        %775 = vmatprep.subr.mxu0 0.0
        %776 = vmatpush1.msra.mxu0 0.0
        %777 = vmatprep.subr.mxu0 0.0
        %778 = vmatpush1.msra.mxu0 0.0
        %779 = vmatprep.subr.mxu0 0.0
        %780 = vmatpush1.msra.mxu0 0.0
        %781 = vmatprep.subr.mxu0 0.0
        %782 = vmatpush1.msra.mxu0 0.0
        %783 = vmatprep.subr.mxu0 0.0
        %784 = vmatpush1.msra.mxu0 0.0
        %785 = vmatprep.subr.mxu0 0.0
        %786 = vmatpush1.msra.mxu0 0.0
        %787 = vmatprep.subr.mxu0 0.0
        %788 = vmatpush1.msra.mxu0 0.0
        %789 = vmatprep.subr.mxu0 0.0
        %790 = vmatpush1.msra.mxu0 0.0
        %791 = vmatprep.subr.mxu0 0.0
        %792 = vmatpush1.msra.mxu0 0.0
        %793 = vmatprep.subr.mxu0 0.0
        %794 = vmatpush1.msra.mxu0 0.0
        %795 = vmatprep.subr.mxu0 0.0
        %796 = vmatpush1.msra.mxu0 0.0
        %797 = vmatprep.subr.mxu0 0.0
        %798 = vmatpush1.msra.mxu0 0.0
        %799 = vmatprep.subr.mxu0 0.0
        %800 = vmatpush1.msra.mxu0 0.0
        %801 = vmatprep.mubr.f32.mxu0 0.0
        %802 = vmatmul.mubr.f32.gmra.mrb[0].mxu0 %v451
        %v803 = vpop.f32.mrb[0].mxu0
        %v804 = vadd.f32 0.0, %v803
        %v805 = vpop.f32.mrb[0].mxu0
        %806 = vdwg.mxu0
        %807 = vst [vmem:[%s236 + $0x20] sm:$0xff] %v804
        %808 = vmatprep.subr.mxu0 0.0
        %809 = vmatpush1.msra.mxu0 %v421
        %810 = vmatprep.subr.mxu0 0.0
        %811 = vmatpush1.msra.mxu0 %v426
        %812 = vmatprep.subr.mxu0 0.0
        %813 = vmatpush1.msra.mxu0 0.0
        %814 = vmatprep.subr.mxu0 0.0
        %815 = vmatpush1.msra.mxu0 0.0
        %816 = vmatprep.subr.mxu0 0.0
        %817 = vmatpush1.msra.mxu0 0.0
        %818 = vmatprep.subr.mxu0 0.0
        %819 = vmatpush1.msra.mxu0 0.0
        %820 = vmatprep.subr.mxu0 0.0
        %821 = vmatpush1.msra.mxu0 0.0
        %822 = vmatprep.subr.mxu0 0.0
        %823 = vmatpush1.msra.mxu0 0.0
        %824 = vmatprep.subr.mxu0 0.0
        %825 = vmatpush1.msra.mxu0 0.0
        %826 = vmatprep.subr.mxu0 0.0
        %827 = vmatpush1.msra.mxu0 0.0
        %828 = vmatprep.subr.mxu0 0.0
        %829 = vmatpush1.msra.mxu0 0.0
        %830 = vmatprep.subr.mxu0 0.0
        %831 = vmatpush1.msra.mxu0 0.0
        %832 = vmatprep.subr.mxu0 0.0
        %833 = vmatpush1.msra.mxu0 0.0
        %834 = vmatprep.subr.mxu0 0.0
        %835 = vmatpush1.msra.mxu0 0.0
        %836 = vmatprep.subr.mxu0 0.0
        %837 = vmatpush1.msra.mxu0 0.0
        %838 = vmatprep.subr.mxu0 0.0
        %839 = vmatpush1.msra.mxu0 0.0
        %840 = vmatprep.subr.mxu0 0.0
        %841 = vmatpush1.msra.mxu0 0.0
        %842 = vmatprep.subr.mxu0 0.0
        %843 = vmatpush1.msra.mxu0 0.0
        %844 = vmatprep.subr.mxu0 0.0
        %845 = vmatpush1.msra.mxu0 0.0
        %846 = vmatprep.subr.mxu0 0.0
        %847 = vmatpush1.msra.mxu0 0.0
        %848 = vmatprep.subr.mxu0 0.0
        %849 = vmatpush1.msra.mxu0 0.0
        %850 = vmatprep.subr.mxu0 0.0
        %851 = vmatpush1.msra.mxu0 0.0
        %852 = vmatprep.subr.mxu0 0.0
        %853 = vmatpush1.msra.mxu0 0.0
        %854 = vmatprep.subr.mxu0 0.0
        %855 = vmatpush1.msra.mxu0 0.0
        %856 = vmatprep.subr.mxu0 0.0
        %857 = vmatpush1.msra.mxu0 0.0
        %858 = vmatprep.subr.mxu0 0.0
        %859 = vmatpush1.msra.mxu0 0.0
        %860 = vmatprep.subr.mxu0 0.0
        %861 = vmatpush1.msra.mxu0 0.0
        %862 = vmatprep.subr.mxu0 0.0
        %863 = vmatpush1.msra.mxu0 0.0
        %864 = vmatprep.subr.mxu0 0.0
        %865 = vmatpush1.msra.mxu0 0.0
        %866 = vmatprep.subr.mxu0 0.0
        %867 = vmatpush1.msra.mxu0 0.0
        %868 = vmatprep.subr.mxu0 0.0
        %869 = vmatpush1.msra.mxu0 0.0
        %870 = vmatprep.subr.mxu0 0.0
        %871 = vmatpush1.msra.mxu0 0.0
        %872 = vmatprep.mubr.f32.mxu0 0.0
        %873 = vmatmul.mubr.f32.gmra.mrb[0].mxu0 %v451
        %v874 = vpop.f32.mrb[0].mxu0
        %v875 = vadd.f32 0.0, %v874
        %v876 = vpop.f32.mrb[0].mxu0
        %877 = vdwg.mxu0
        %878 = vst [vmem:[%s236 + $0x28] sm:$0xff] %v875
        %879 = vmatprep.subr.mxu0 0.0
        %880 = vmatpush1.msra.mxu0 %v431
        %881 = vmatprep.subr.mxu0 0.0
        %882 = vmatpush1.msra.mxu0 %v436
        %883 = vmatprep.subr.mxu0 0.0
        %884 = vmatpush1.msra.mxu0 0.0
        %885 = vmatprep.subr.mxu0 0.0
        %886 = vmatpush1.msra.mxu0 0.0
        %887 = vmatprep.subr.mxu0 0.0
        %888 = vmatpush1.msra.mxu0 0.0
        %889 = vmatprep.subr.mxu0 0.0
        %890 = vmatpush1.msra.mxu0 0.0
        %891 = vmatprep.subr.mxu0 0.0
        %892 = vmatpush1.msra.mxu0 0.0
        %893 = vmatprep.subr.mxu0 0.0
        %894 = vmatpush1.msra.mxu0 0.0
        %895 = vmatprep.subr.mxu0 0.0
        %896 = vmatpush1.msra.mxu0 0.0
        %897 = vmatprep.subr.mxu0 0.0
        %898 = vmatpush1.msra.mxu0 0.0
        %899 = vmatprep.subr.mxu0 0.0
        %900 = vmatpush1.msra.mxu0 0.0
        %901 = vmatprep.subr.mxu0 0.0
        %902 = vmatpush1.msra.mxu0 0.0
        %903 = vmatprep.subr.mxu0 0.0
        %904 = vmatpush1.msra.mxu0 0.0
        %905 = vmatprep.subr.mxu0 0.0
        %906 = vmatpush1.msra.mxu0 0.0
        %907 = vmatprep.subr.mxu0 0.0
        %908 = vmatpush1.msra.mxu0 0.0
        %909 = vmatprep.subr.mxu0 0.0
        %910 = vmatpush1.msra.mxu0 0.0
        %911 = vmatprep.subr.mxu0 0.0
        %912 = vmatpush1.msra.mxu0 0.0
        %913 = vmatprep.subr.mxu0 0.0
        %914 = vmatpush1.msra.mxu0 0.0
        %915 = vmatprep.subr.mxu0 0.0
        %916 = vmatpush1.msra.mxu0 0.0
        %917 = vmatprep.subr.mxu0 0.0
        %918 = vmatpush1.msra.mxu0 0.0
        %919 = vmatprep.subr.mxu0 0.0
        %920 = vmatpush1.msra.mxu0 0.0
        %921 = vmatprep.subr.mxu0 0.0
        %922 = vmatpush1.msra.mxu0 0.0
        %923 = vmatprep.subr.mxu0 0.0
        %924 = vmatpush1.msra.mxu0 0.0
        %925 = vmatprep.subr.mxu0 0.0
        %926 = vmatpush1.msra.mxu0 0.0
        %927 = vmatprep.subr.mxu0 0.0
        %928 = vmatpush1.msra.mxu0 0.0
        %929 = vmatprep.subr.mxu0 0.0
        %930 = vmatpush1.msra.mxu0 0.0
        %931 = vmatprep.subr.mxu0 0.0
        %932 = vmatpush1.msra.mxu0 0.0
        %933 = vmatprep.subr.mxu0 0.0
        %934 = vmatpush1.msra.mxu0 0.0
        %935 = vmatprep.subr.mxu0 0.0
        %936 = vmatpush1.msra.mxu0 0.0
        %937 = vmatprep.subr.mxu0 0.0
        %938 = vmatpush1.msra.mxu0 0.0
        %939 = vmatprep.subr.mxu0 0.0
        %940 = vmatpush1.msra.mxu0 0.0
        %941 = vmatprep.subr.mxu0 0.0
        %942 = vmatpush1.msra.mxu0 0.0
        %943 = vmatprep.mubr.f32.mxu0 0.0
        %944 = vmatmul.mubr.f32.gmra.mrb[0].mxu0 %v451
        %v945 = vpop.f32.mrb[0].mxu0
        %v946 = vadd.f32 0.0, %v945
        %v947 = vpop.f32.mrb[0].mxu0
        %948 = vdwg.mxu0
        %949 = vst [vmem:[%s236 + $0x30] sm:$0xff] %v946
        %950 = vmatprep.subr.mxu0 0.0
        %951 = vmatpush1.msra.mxu0 %v441
        %952 = vmatprep.subr.mxu0 0.0
        %953 = vmatpush1.msra.mxu0 %v446
        %954 = vmatprep.subr.mxu0 0.0
        %955 = vmatpush1.msra.mxu0 0.0
        %956 = vmatprep.subr.mxu0 0.0
        %957 = vmatpush1.msra.mxu0 0.0
        %958 = vmatprep.subr.mxu0 0.0
        %959 = vmatpush1.msra.mxu0 0.0
        %960 = vmatprep.subr.mxu0 0.0
        %961 = vmatpush1.msra.mxu0 0.0
        %962 = vmatprep.subr.mxu0 0.0
        %963 = vmatpush1.msra.mxu0 0.0
        %964 = vmatprep.subr.mxu0 0.0
        %965 = vmatpush1.msra.mxu0 0.0
        %966 = vmatprep.subr.mxu0 0.0
        %967 = vmatpush1.msra.mxu0 0.0
        %968 = vmatprep.subr.mxu0 0.0
        %969 = vmatpush1.msra.mxu0 0.0
        %970 = vmatprep.subr.mxu0 0.0
        %971 = vmatpush1.msra.mxu0 0.0
        %972 = vmatprep.subr.mxu0 0.0
        %973 = vmatpush1.msra.mxu0 0.0
        %974 = vmatprep.subr.mxu0 0.0
        %975 = vmatpush1.msra.mxu0 0.0
        %976 = vmatprep.subr.mxu0 0.0
        %977 = vmatpush1.msra.mxu0 0.0
        %978 = vmatprep.subr.mxu0 0.0
        %979 = vmatpush1.msra.mxu0 0.0
        %980 = vmatprep.subr.mxu0 0.0
        %981 = vmatpush1.msra.mxu0 0.0
        %982 = vmatprep.subr.mxu0 0.0
        %983 = vmatpush1.msra.mxu0 0.0
        %984 = vmatprep.subr.mxu0 0.0
        %985 = vmatpush1.msra.mxu0 0.0
        %986 = vmatprep.subr.mxu0 0.0
        %987 = vmatpush1.msra.mxu0 0.0
        %988 = vmatprep.subr.mxu0 0.0
        %989 = vmatpush1.msra.mxu0 0.0
        %990 = vmatprep.subr.mxu0 0.0
        %991 = vmatpush1.msra.mxu0 0.0
        %992 = vmatprep.subr.mxu0 0.0
        %993 = vmatpush1.msra.mxu0 0.0
        %994 = vmatprep.subr.mxu0 0.0
        %995 = vmatpush1.msra.mxu0 0.0
        %996 = vmatprep.subr.mxu0 0.0
        %997 = vmatpush1.msra.mxu0 0.0
        %998 = vmatprep.subr.mxu0 0.0
        %999 = vmatpush1.msra.mxu0 0.0
        %1000 = vmatprep.subr.mxu0 0.0
        %1001 = vmatpush1.msra.mxu0 0.0
        %1002 = vmatprep.subr.mxu0 0.0
        %1003 = vmatpush1.msra.mxu0 0.0
        %1004 = vmatprep.subr.mxu0 0.0
        %1005 = vmatpush1.msra.mxu0 0.0
        %1006 = vmatprep.subr.mxu0 0.0
        %1007 = vmatpush1.msra.mxu0 0.0
        %1008 = vmatprep.subr.mxu0 0.0
        %1009 = vmatpush1.msra.mxu0 0.0
        %1010 = vmatprep.subr.mxu0 0.0
        %1011 = vmatpush1.msra.mxu0 0.0
        %1012 = vmatprep.subr.mxu0 0.0
        %1013 = vmatpush1.msra.mxu0 0.0
        %1014 = vmatprep.mubr.f32.mxu0 0.0
        %1015 = vmatmul.mubr.f32.gmra.mrb[0].mxu0 %v451
        %v1016 = vpop.f32.mrb[0].mxu0
        %v1017 = vadd.f32 0.0, %v1016
        %v1018 = vpop.f32.mrb[0].mxu0
        %1019 = vdwg.mxu0
        %1020 = vst [vmem:[%s236 + $0x38] sm:$0xff] %v1017
        %s1021 = sand.u32 %s102, 1
        %s1022 = scalar_lea.sflag [#allocation4], %s1021
        %s1023 = sand.u32 %s102, 1
        %s1024 = smul.addr %s1023, 64
        %s1025 = scalar_lea.vmem [#allocation8], %s1024
        // Predicated region
        $region45: #{tpu_custom_call.1} parent=31 // pred_check
          %p1026 = pneg %p112
        $region46: #{tpu_custom_call.1} parent=31 // pred_check_branch
          %1028 = sbr.rel (%p1026) target = $region48
        $region47: #{tpu_custom_call.1} parent=31 // pred_region
          %s1030 = ssub.s32 1024, 1024
          %1031 = vsyncadd %s1022, %s1030
          %s1032 = smul.addr %s21, 128
          %s1033 = scalar_lea.hbm %s3, %s1032
          %s1034 = sshll.u32 %s1025, 4
          %s1035 = int_to_ptr.vmem [resolvable:$true] %s1034
          %1040 = dma.vmem_to_hbm [thread:$0]  %s1035, 1024, %s1033, %s1022, 128, 512, 8
        $region48: #{tpu_custom_call.1} parent=31 // pred_fallthru
          _
      $region32: #{tpu_custom_call.1} parent=5 // pred_fallthru
        _
      %p1041 = scmp.le.s32.totalorder 2, %s16
      // Predicated region
      $region49: #{tpu_custom_call.1} parent=5 // pred_check
        %p1042 = pneg %p1041
      $region50: #{tpu_custom_call.1} parent=5 // pred_check_branch
        %1044 = sbr.rel (%p1042) target = $region52
      $region51: #{tpu_custom_call.1} parent=5 // pred_region
        %s1045 = ssub.s32 %s16, 2
        // Predicated region
        $region53: #{tpu_custom_call.1} parent=51 // pred_check
          %p1046 = pneg %p118
        $region54: #{tpu_custom_call.1} parent=51 // pred_check_branch
          %1048 = sbr.rel (%p1046) target = $region56
        $region55: #{tpu_custom_call.1} parent=51 // pred_region
          %s1049 = sand.u32 %s103, 1
          %s1050 = scalar_lea.sflag [#allocation4], %s1049
          %s1051 = sand.u32 %s103, 1
          %s1052 = smul.addr %s1051, 64
          %s1053 = scalar_lea.vmem [#allocation8], %s1052
          %1054 = dma.done %s1050, 1024
        $region56: #{tpu_custom_call.1} parent=51 // pred_fallthru
          _
      $region52: #{tpu_custom_call.1} parent=5 // pred_fallthru
        _
    $region6: #{tpu_custom_call.1} parent=1 // loop_footer
      %s20 = sadd.s32 1, %s16
    $region7: #{tpu_custom_call.1} parent=1 // loop_footer_branch
      %15 = sbr.rel target = $region3
    $region8: #{tpu_custom_call.1} parent=1 // loop_exit
      _
    %1055 = vsyncpa [#allocation3], 1
    %s1056 = scalar_lea.sflag [#allocation3], 1
    %1057 = vsyncpa %s1056, 1
    %1058 = vsyncpa [#allocation6], 1
    %s1059 = scalar_lea.sflag [#allocation6], 1
    %1060 = vsyncpa %s1059, 1
    %1061 = vsyncpa [#allocation4], 1
    %s1062 = scalar_lea.sflag [#allocation4], 1
    %1063 = vsyncpa %s1062, 1

</llo_original>
